<compile_context>
chip_gen: v7x
topology: tpu7x:2x2x1
jax: 0.10.0
libtpu: 0.0.40
codegen_flags: <defaults>
</compile_context>

<pallas_src>
import jax
import jax.numpy as jnp
import numpy as np
from jax import lax
from jax.experimental import pallas as pl
from jax.experimental.pallas import tpu as pltpu

# Small, forward-consistent hyperparameters (DECISION_DIM / cmd_args.output_dim
# are globals in the original repo; fixed here deterministically).
DECISION_DIM = 8
MAX_LEN = 32
LATENT_DIM = 16
OUTPUT_DIM = 4
L1 = MAX_LEN - 9 + 1          # 24
L2 = L1 - 9 + 1               # 16
L3 = L2 - 11 + 1              # 6   (last_conv_size)

H1_PAD = 256                  # 9*L1 = 216 -> 256  (full MXU pass, no ragged tiles)
H2_PAD = 256                  # 9*L2 = 144 -> 256
H3_PAD = 64                   # 10*L3 = 60 -> 64   (sublane-aligned)
HID_PAD = 448                 # 435 -> 448         (lane-aligned, 3.5*128)
OUT_PAD = 8                   # output_dim 4 -> 8  (sublane-aligned)

MAX_B_TILE = 2048             # VMEM-safe on v5e/v6e/v7x with the limit below
VMEM_LIMIT_BYTES = 32 * 1024 * 1024


def regressor_kernel(x_ref, w1_ref, b1_ref, w2_ref, b2_ref, w3_ref, b3_ref,
                     wf_ref, bf_ref, wm_ref, bm_ref, wl_ref, bl_ref, out_ref):
    # x tile arrives as (Bt, C*L) bf16; layer 1 contracts both operands' dim 1
    # (A @ B^T form, same dimension numbers flash-attention uses), so no
    # wrapper- or kernel-side transpose of the dominant tensor is needed.
    x = x_ref[...]                                                  # (Bt, 256) bf16
    h1 = lax.dot_general(w1_ref[...], x, (((1,), (1,)), ((), ())),
                         preferred_element_type=jnp.float32)        # (256, Bt) f32
    h1 = jnp.maximum(h1 + b1_ref[...], 0.0).astype(jnp.bfloat16)

    h2 = jnp.dot(w2_ref[...], h1, preferred_element_type=jnp.float32)
    h2 = jnp.maximum(h2 + b2_ref[...], 0.0).astype(jnp.bfloat16)    # (256, Bt)

    h3 = jnp.dot(w3_ref[...], h2, preferred_element_type=jnp.float32)
    h3 = jnp.maximum(h3 + b3_ref[...], 0.0).astype(jnp.bfloat16)    # (64, Bt)

    h = jnp.dot(wf_ref[...], h3, preferred_element_type=jnp.float32)
    h = jnp.maximum(h + bf_ref[...], 0.0).astype(jnp.bfloat16)      # (448, Bt)

    z = jnp.dot(wm_ref[...], h, preferred_element_type=jnp.float32)
    z = jnp.maximum(z + bm_ref[...], 0.0).astype(jnp.bfloat16)      # (16, Bt)

    y = jnp.dot(wl_ref[...], z, preferred_element_type=jnp.float32)
    out_ref[...] = jnp.tanh(y + bl_ref[...])                        # (8, Bt) f32


def _conv_as_matmul(w, l_in):
    """Fold a valid Conv1d weight (O, C_in, K) into a dense Toeplitz matrix of
    shape (O*L_out, C_in*L_in) so the conv becomes a single matmul with rows
    in channel-major (o*L_out + t) order.  Pure weight repacking (glue)."""
    o_ch, c_in, k = w.shape
    l_out = l_in - k + 1
    t = jnp.arange(l_out)[:, None]                  # (L_out, 1)
    l = jnp.arange(l_in)[None, :]                   # (1, L_in)
    tap = l - t                                     # (L_out, L_in)
    valid = (tap >= 0) & (tap < k)
    wg = w[:, :, jnp.clip(tap, 0, k - 1)] * valid[None, None, :, :]
    return jnp.transpose(wg, (0, 2, 1, 3)).reshape(o_ch * l_out, c_in * l_in)


def _pad_to(a, rows=None, cols=None):
    r = a.shape[0] if rows is None else rows
    c = a.shape[1] if cols is None else cols
    return jnp.zeros((r, c), a.dtype).at[:a.shape[0], :a.shape[1]].set(a)


def _choose_tiling(B, max_tile=MAX_B_TILE):
    """Pick (b_tile, n_tiles): lane-aligned tiles, at least two tiles when
    B >= 256 (v7x megacore), capped at max_tile (VMEM on v5e/v7x), and sized
    to avoid large zero-padded tails."""
    bp128 = 128 * pl.cdiv(B, 128)
    if bp128 <= 128:
        return 128, 1
    n_tiles = max(2, pl.cdiv(bp128, max_tile))
    b_tile = 128 * pl.cdiv(pl.cdiv(B, n_tiles), 128)
    n_tiles = pl.cdiv(B, b_tile)
    return b_tile, n_tiles


def init_params(key):
    """Deterministic init matching the PyTorch module's parameter shapes."""
    ks = jax.random.split(key, 12)

    def rnd(k, shape, scale=0.1):
        return scale * jax.random.normal(k, shape, dtype=jnp.float32)

    return {
        'conv1_w': rnd(ks[0], (9, DECISION_DIM, 9)),        # (O, C_in, K)
        'conv1_b': rnd(ks[1], (9,)),
        'conv2_w': rnd(ks[2], (9, 9, 9)),
        'conv2_b': rnd(ks[3], (9,)),
        'conv3_w': rnd(ks[4], (10, 9, 11)),
        'conv3_b': rnd(ks[5], (10,)),
        'w1_w':    rnd(ks[6], (435, L3 * 10)),              # (out, in)
        'w1_b':    rnd(ks[7], (435,)),
        'mean_w':  rnd(ks[8], (LATENT_DIM, 435)),
        'mean_b':  rnd(ks[9], (LATENT_DIM,)),
        'label_w': rnd(ks[10], (OUTPUT_DIM, LATENT_DIM)),
        'label_b': rnd(ks[11], (OUTPUT_DIM,)),
    }


def regressor_forward(x_ncl, p, b_tile=None):
    """x_ncl: (B, DECISION_DIM, max_len) in PyTorch NCL layout."""
    B, C, L = x_ncl.shape
    assert C == DECISION_DIM and L == MAX_LEN

    if b_tile is None:
        b_tile, n_tiles = _choose_tiling(B)
    else:
        assert b_tile % 128 == 0
        n_tiles = pl.cdiv(B, b_tile)
    bp = n_tiles * b_tile

    # x stays in its natural (B, C*L) row-major layout (reshape only, no HBM
    # transpose); zero-pad the batch dim up to the tile grid when needed.
    x = x_ncl.reshape(B, C * L).astype(jnp.bfloat16)
    if bp != B:
        x = jnp.zeros((bp, C * L), jnp.bfloat16).at[:B, :].set(x)

    # ---- weight repacking (pure glue on parameters, data-independent) ----
    f32, bf16 = jnp.float32, jnp.bfloat16
    w1 = _pad_to(_conv_as_matmul(p['conv1_w'].astype(f32), MAX_LEN),
                 rows=H1_PAD).astype(bf16)                            # (256, 256)
    w2 = _pad_to(_conv_as_matmul(p['conv2_w'].astype(f32), L1),
                 rows=H2_PAD, cols=H1_PAD).astype(bf16)               # (256, 256)
    w3 = _pad_to(_conv_as_matmul(p['conv3_w'].astype(f32), L2),
                 rows=H3_PAD, cols=H2_PAD).astype(bf16)               # (64, 256)
    b1 = _pad_to(jnp.repeat(p['conv1_b'], L1).reshape(-1, 1).astype(f32),
                 rows=H1_PAD)                                         # (256, 1)
    b2 = _pad_to(jnp.repeat(p['conv2_b'], L2).reshape(-1, 1).astype(f32),
                 rows=H2_PAD)                                         # (256, 1)
    b3 = _pad_to(jnp.repeat(p['conv3_b'], L3).reshape(-1, 1).astype(f32),
                 rows=H3_PAD)                                         # (64, 1)

    # PyTorch .view flatten is channel-major == our (o*L3 + t) row order,
    # so w1_w is used as-is (zero-padded to aligned sizes).
    wf = _pad_to(p['w1_w'].astype(f32), rows=HID_PAD, cols=H3_PAD).astype(bf16)
    bf_ = _pad_to(p['w1_b'].reshape(-1, 1).astype(f32), rows=HID_PAD)
    wm = _pad_to(p['mean_w'].astype(f32), cols=HID_PAD).astype(bf16)  # (16, 448)
    bm = p['mean_b'].reshape(-1, 1).astype(f32)
    wl = _pad_to(p['label_w'].astype(f32), rows=OUT_PAD).astype(bf16) # (8, 16)
    bl = _pad_to(p['label_b'].reshape(-1, 1).astype(f32), rows=OUT_PAD)

    args = (x, w1, b1, w2, b2, w3, b3, wf, bf_, wm, bm, wl, bl)

    def resident(a):
        # Full-array block, same tile every grid step (stays VMEM-resident).
        return pl.BlockSpec(a.shape, lambda i: (0, 0))

    # TODO(synk): if profiling shows the x DMA exposed on v5e, add
    # pipeline_mode=pl.Buffered(3) to this x BlockSpec only.
    in_specs = [pl.BlockSpec((b_tile, C * L), lambda i: (i, 0))]
    in_specs += [resident(a) for a in args[1:]]

    out = pl.pallas_call(
        regressor_kernel,
        out_shape=jax.ShapeDtypeStruct((OUT_PAD, bp), jnp.float32),
        grid=(n_tiles,),
        in_specs=in_specs,
        out_specs=pl.BlockSpec((OUT_PAD, b_tile), lambda i: (0, i)),
        compiler_params=pltpu.CompilerParams(
            dimension_semantics=("parallel",),     # batch tiles are independent
            vmem_limit_bytes=VMEM_LIMIT_BYTES),
    )(*args)

    return out[:OUTPUT_DIM, :B].T                                     # (B, out)


def ref_forward(x_ncl, p):
    """Pure-JAX f32 reference with exact PyTorch semantics (NCL conv, .view flatten)."""
    def conv1d(x, w, b):
        O, Cin, K = w.shape
        Lo = x.shape[2] - K + 1
        out = jnp.zeros((x.shape[0], O, Lo), jnp.float32)
        for k in range(K):
            out = out + jnp.einsum('bcl,oc->bol', x[:, :, k:k + Lo], w[:, :, k])
        return out + b[None, :, None]

    h1 = jax.nn.relu(conv1d(x_ncl, p['conv1_w'], p['conv1_b']))
    h2 = jax.nn.relu(conv1d(h1, p['conv2_w'], p['conv2_b']))
    h3 = jax.nn.relu(conv1d(h2, p['conv3_w'], p['conv3_b']))
    flat = h3.reshape(x_ncl.shape[0], -1)                          # channel-major
    h = jax.nn.relu(flat @ p['w1_w'].T + p['w1_b'])
    z = jax.nn.relu(h @ p['mean_w'].T + p['mean_b'])
    return jnp.tanh(z @ p['label_w'].T + p['label_b'])


if __name__ == "__main__":
    key = jax.random.PRNGKey(0)
    pkey, xkey = jax.random.split(key)
    params = init_params(pkey)
    x = jax.random.normal(xkey, (2, DECISION_DIM, MAX_LEN), dtype=jnp.float32)

    y = regressor_forward(x, params)
    y = jax.block_until_ready(y)

    y_ref = ref_forward(x, params)
    # bf16 operands with f32 accumulation: tolerance relaxed vs pure-f32 path.
    np.testing.assert_allclose(np.asarray(y), np.asarray(y_ref),
                               rtol=5e-2, atol=5e-2)
    print("KERNEL_OK")
</pallas_src>

<mosaic_0001>
module attributes {stable_mosaic.version = 11 : i64} {
  func.func @regressor_kernel(%arg0: i32, %arg1: memref<128x256xbf16, #tpu.memory_space<vmem>>, %arg2: memref<256x256xbf16, #tpu.memory_space<vmem>>, %arg3: memref<256x1xf32, #tpu.memory_space<vmem>>, %arg4: memref<256x256xbf16, #tpu.memory_space<vmem>>, %arg5: memref<256x1xf32, #tpu.memory_space<vmem>>, %arg6: memref<64x256xbf16, #tpu.memory_space<vmem>>, %arg7: memref<64x1xf32, #tpu.memory_space<vmem>>, %arg8: memref<448x64xbf16, #tpu.memory_space<vmem>>, %arg9: memref<448x1xf32, #tpu.memory_space<vmem>>, %arg10: memref<16x448xbf16, #tpu.memory_space<vmem>>, %arg11: memref<16x1xf32, #tpu.memory_space<vmem>>, %arg12: memref<8x16xbf16, #tpu.memory_space<vmem>>, %arg13: memref<8x1xf32, #tpu.memory_space<vmem>>, %arg14: memref<8x128xf32, #tpu.memory_space<vmem>>) attributes {dimension_semantics = [#tpu.dimension_semantics<parallel>], iteration_bounds = array<i64: 1>, scalar_prefetch = 0 : i64, scratch_operands = 0 : i64, tpu.core_type = #tpu.core_type<tc>, window_params = [{transform_indices = @transform_0, window_bounds = array<i64: 128, 256>}, {pipeline_mode = #tpu.pipeline_mode<synchronous>, transform_indices = @transform_1, window_bounds = array<i64: 256, 256>}, {pipeline_mode = #tpu.pipeline_mode<synchronous>, transform_indices = @transform_2, window_bounds = array<i64: 256, 1>}, {pipeline_mode = #tpu.pipeline_mode<synchronous>, transform_indices = @transform_3, window_bounds = array<i64: 256, 256>}, {pipeline_mode = #tpu.pipeline_mode<synchronous>, transform_indices = @transform_4, window_bounds = array<i64: 256, 1>}, {pipeline_mode = #tpu.pipeline_mode<synchronous>, transform_indices = @transform_5, window_bounds = array<i64: 64, 256>}, {pipeline_mode = #tpu.pipeline_mode<synchronous>, transform_indices = @transform_6, window_bounds = array<i64: 64, 1>}, {pipeline_mode = #tpu.pipeline_mode<synchronous>, transform_indices = @transform_7, window_bounds = array<i64: 448, 64>}, {pipeline_mode = #tpu.pipeline_mode<synchronous>, transform_indices = @transform_8, window_bounds = array<i64: 448, 1>}, {pipeline_mode = #tpu.pipeline_mode<synchronous>, transform_indices = @transform_9, window_bounds = array<i64: 16, 448>}, {pipeline_mode = #tpu.pipeline_mode<synchronous>, transform_indices = @transform_10, window_bounds = array<i64: 16, 1>}, {pipeline_mode = #tpu.pipeline_mode<synchronous>, transform_indices = @transform_11, window_bounds = array<i64: 8, 16>}, {pipeline_mode = #tpu.pipeline_mode<synchronous>, transform_indices = @transform_12, window_bounds = array<i64: 8, 1>}, {transform_indices = @transform_13, window_bounds = array<i64: 8, 128>}]} {
    %c0 = arith.constant 0 : index
    %c0_0 = arith.constant 0 : index
    %0 = vector.load %arg1[%c0, %c0_0] : memref<128x256xbf16, #tpu.memory_space<vmem>>, vector<128x256xbf16>
    %c0_1 = arith.constant 0 : index
    %c0_2 = arith.constant 0 : index
    %1 = vector.load %arg2[%c0_1, %c0_2] : memref<256x256xbf16, #tpu.memory_space<vmem>>, vector<256x256xbf16>
    %cst = arith.constant dense<0.000000e+00> : vector<256x128xf32>
    %2 = tpu.matmul %1, %0, %cst {dimension_numbers = #tpu.dot_dimension_numbers<[1], [1], [0], [0], [0, 0, 1, 0], [], []>} : vector<256x256xbf16>, vector<128x256xbf16>, vector<256x128xf32> -> vector<256x128xf32>
    %c0_3 = arith.constant 0 : index
    %c0_4 = arith.constant 0 : index
    %3 = vector.load %arg3[%c0_3, %c0_4] : memref<256x1xf32, #tpu.memory_space<vmem>>, vector<256x1xf32>
    %4 = vector.broadcast %3 : vector<256x1xf32> to vector<256x128xf32>
    %5 = arith.addf %2, %4 : vector<256x128xf32>
    %cst_5 = arith.constant 0.000000e+00 : f32
    %6 = vector.broadcast %cst_5 : f32 to vector<256x128xf32>
    %7 = arith.maximumf %5, %6 : vector<256x128xf32>
    %8 = arith.truncf %7 : vector<256x128xf32> to vector<256x128xbf16>
    %c0_6 = arith.constant 0 : index
    %c0_7 = arith.constant 0 : index
    %9 = vector.load %arg4[%c0_6, %c0_7] : memref<256x256xbf16, #tpu.memory_space<vmem>>, vector<256x256xbf16>
    %cst_8 = arith.constant dense<0.000000e+00> : vector<256x128xf32>
    %10 = tpu.matmul %9, %8, %cst_8 {dimension_numbers = #tpu.dot_dimension_numbers<[1], [0], [0], [1], [0, 0, 1, 1], [], []>} : vector<256x256xbf16>, vector<256x128xbf16>, vector<256x128xf32> -> vector<256x128xf32>
    %c0_9 = arith.constant 0 : index
    %c0_10 = arith.constant 0 : index
    %11 = vector.load %arg5[%c0_9, %c0_10] : memref<256x1xf32, #tpu.memory_space<vmem>>, vector<256x1xf32>
    %12 = vector.broadcast %11 : vector<256x1xf32> to vector<256x128xf32>
    %13 = arith.addf %10, %12 : vector<256x128xf32>
    %cst_11 = arith.constant 0.000000e+00 : f32
    %14 = vector.broadcast %cst_11 : f32 to vector<256x128xf32>
    %15 = arith.maximumf %13, %14 : vector<256x128xf32>
    %16 = arith.truncf %15 : vector<256x128xf32> to vector<256x128xbf16>
    %c0_12 = arith.constant 0 : index
    %c0_13 = arith.constant 0 : index
    %17 = vector.load %arg6[%c0_12, %c0_13] : memref<64x256xbf16, #tpu.memory_space<vmem>>, vector<64x256xbf16>
    %cst_14 = arith.constant dense<0.000000e+00> : vector<64x128xf32>
    %18 = tpu.matmul %17, %16, %cst_14 {dimension_numbers = #tpu.dot_dimension_numbers<[1], [0], [0], [1], [0, 0, 1, 1], [], []>} : vector<64x256xbf16>, vector<256x128xbf16>, vector<64x128xf32> -> vector<64x128xf32>
    %c0_15 = arith.constant 0 : index
    %c0_16 = arith.constant 0 : index
    %19 = vector.load %arg7[%c0_15, %c0_16] : memref<64x1xf32, #tpu.memory_space<vmem>>, vector<64x1xf32>
    %20 = vector.broadcast %19 : vector<64x1xf32> to vector<64x128xf32>
    %21 = arith.addf %18, %20 : vector<64x128xf32>
    %cst_17 = arith.constant 0.000000e+00 : f32
    %22 = vector.broadcast %cst_17 : f32 to vector<64x128xf32>
    %23 = arith.maximumf %21, %22 : vector<64x128xf32>
    %24 = arith.truncf %23 : vector<64x128xf32> to vector<64x128xbf16>
    %c0_18 = arith.constant 0 : index
    %c0_19 = arith.constant 0 : index
    %25 = vector.load %arg8[%c0_18, %c0_19] : memref<448x64xbf16, #tpu.memory_space<vmem>>, vector<448x64xbf16>
    %cst_20 = arith.constant dense<0.000000e+00> : vector<448x128xf32>
    %26 = tpu.matmul %25, %24, %cst_20 {dimension_numbers = #tpu.dot_dimension_numbers<[1], [0], [0], [1], [0, 0, 1, 1], [], []>} : vector<448x64xbf16>, vector<64x128xbf16>, vector<448x128xf32> -> vector<448x128xf32>
    %c0_21 = arith.constant 0 : index
    %c0_22 = arith.constant 0 : index
    %27 = vector.load %arg9[%c0_21, %c0_22] : memref<448x1xf32, #tpu.memory_space<vmem>>, vector<448x1xf32>
    %28 = vector.broadcast %27 : vector<448x1xf32> to vector<448x128xf32>
    %29 = arith.addf %26, %28 : vector<448x128xf32>
    %cst_23 = arith.constant 0.000000e+00 : f32
    %30 = vector.broadcast %cst_23 : f32 to vector<448x128xf32>
    %31 = arith.maximumf %29, %30 : vector<448x128xf32>
    %32 = arith.truncf %31 : vector<448x128xf32> to vector<448x128xbf16>
    %c0_24 = arith.constant 0 : index
    %c0_25 = arith.constant 0 : index
    %33 = vector.load %arg10[%c0_24, %c0_25] : memref<16x448xbf16, #tpu.memory_space<vmem>>, vector<16x448xbf16>
    %cst_26 = arith.constant dense<0.000000e+00> : vector<16x128xf32>
    %34 = tpu.matmul %33, %32, %cst_26 {dimension_numbers = #tpu.dot_dimension_numbers<[1], [0], [0], [1], [0, 0, 1, 1], [], []>} : vector<16x448xbf16>, vector<448x128xbf16>, vector<16x128xf32> -> vector<16x128xf32>
    %c0_27 = arith.constant 0 : index
    %c0_28 = arith.constant 0 : index
    %35 = vector.load %arg11[%c0_27, %c0_28] : memref<16x1xf32, #tpu.memory_space<vmem>>, vector<16x1xf32>
    %36 = vector.broadcast %35 : vector<16x1xf32> to vector<16x128xf32>
    %37 = arith.addf %34, %36 : vector<16x128xf32>
    %cst_29 = arith.constant 0.000000e+00 : f32
    %38 = vector.broadcast %cst_29 : f32 to vector<16x128xf32>
    %39 = arith.maximumf %37, %38 : vector<16x128xf32>
    %40 = arith.truncf %39 : vector<16x128xf32> to vector<16x128xbf16>
    %c0_30 = arith.constant 0 : index
    %c0_31 = arith.constant 0 : index
    %41 = vector.load %arg12[%c0_30, %c0_31] : memref<8x16xbf16, #tpu.memory_space<vmem>>, vector<8x16xbf16>
    %cst_32 = arith.constant dense<0.000000e+00> : vector<8x128xf32>
    %42 = tpu.matmul %41, %40, %cst_32 {dimension_numbers = #tpu.dot_dimension_numbers<[1], [0], [0], [1], [0, 0, 1, 1], [], []>} : vector<8x16xbf16>, vector<16x128xbf16>, vector<8x128xf32> -> vector<8x128xf32>
    %c0_33 = arith.constant 0 : index
    %c0_34 = arith.constant 0 : index
    %43 = vector.load %arg13[%c0_33, %c0_34] : memref<8x1xf32, #tpu.memory_space<vmem>>, vector<8x1xf32>
    %44 = vector.broadcast %43 : vector<8x1xf32> to vector<8x128xf32>
    %45 = arith.addf %42, %44 : vector<8x128xf32>
    %46 = math.tanh %45 : vector<8x128xf32>
    %c0_35 = arith.constant 0 : index
    %c0_36 = arith.constant 0 : index
    %47 = vector.load %arg14[%c0_35, %c0_36] : memref<8x128xf32, #tpu.memory_space<vmem>>, vector<8x128xf32>
    tpu.vector_store %arg14[%c0_35, %c0_36], %46 {strides = array<i32>} : memref<8x128xf32, #tpu.memory_space<vmem>>, vector<8x128xf32>,
    return
  }
  func.func @transform_0(%arg0: i32) -> (i32, i32) {
    %c0_i32 = arith.constant 0 : i32
    %c0_i32_0 = arith.constant 0 : i32
    return %arg0, %c0_i32 : i32, i32
  }
  func.func @transform_1(%arg0: i32) -> (i32, i32) {
    %c0_i32 = arith.constant 0 : i32
    %c0_i32_0 = arith.constant 0 : i32
    %c0_i32_1 = arith.constant 0 : i32
    return %c0_i32, %c0_i32_0 : i32, i32
  }
  func.func @transform_2(%arg0: i32) -> (i32, i32) {
    %c0_i32 = arith.constant 0 : i32
    %c0_i32_0 = arith.constant 0 : i32
    %c0_i32_1 = arith.constant 0 : i32
    return %c0_i32, %c0_i32_0 : i32, i32
  }
  func.func @transform_3(%arg0: i32) -> (i32, i32) {
    %c0_i32 = arith.constant 0 : i32
    %c0_i32_0 = arith.constant 0 : i32
    %c0_i32_1 = arith.constant 0 : i32
    return %c0_i32, %c0_i32_0 : i32, i32
  }
  func.func @transform_4(%arg0: i32) -> (i32, i32) {
    %c0_i32 = arith.constant 0 : i32
    %c0_i32_0 = arith.constant 0 : i32
    %c0_i32_1 = arith.constant 0 : i32
    return %c0_i32, %c0_i32_0 : i32, i32
  }
  func.func @transform_5(%arg0: i32) -> (i32, i32) {
    %c0_i32 = arith.constant 0 : i32
    %c0_i32_0 = arith.constant 0 : i32
    %c0_i32_1 = arith.constant 0 : i32
    return %c0_i32, %c0_i32_0 : i32, i32
  }
  func.func @transform_6(%arg0: i32) -> (i32, i32) {
    %c0_i32 = arith.constant 0 : i32
    %c0_i32_0 = arith.constant 0 : i32
    %c0_i32_1 = arith.constant 0 : i32
    return %c0_i32, %c0_i32_0 : i32, i32
  }
  func.func @transform_7(%arg0: i32) -> (i32, i32) {
    %c0_i32 = arith.constant 0 : i32
    %c0_i32_0 = arith.constant 0 : i32
    %c0_i32_1 = arith.constant 0 : i32
    return %c0_i32, %c0_i32_0 : i32, i32
  }
  func.func @transform_8(%arg0: i32) -> (i32, i32) {
    %c0_i32 = arith.constant 0 : i32
    %c0_i32_0 = arith.constant 0 : i32
    %c0_i32_1 = arith.constant 0 : i32
    return %c0_i32, %c0_i32_0 : i32, i32
  }
  func.func @transform_9(%arg0: i32) -> (i32, i32) {
    %c0_i32 = arith.constant 0 : i32
    %c0_i32_0 = arith.constant 0 : i32
    %c0_i32_1 = arith.constant 0 : i32
    return %c0_i32, %c0_i32_0 : i32, i32
  }
  func.func @transform_10(%arg0: i32) -> (i32, i32) {
    %c0_i32 = arith.constant 0 : i32
    %c0_i32_0 = arith.constant 0 : i32
    %c0_i32_1 = arith.constant 0 : i32
    return %c0_i32, %c0_i32_0 : i32, i32
  }
  func.func @transform_11(%arg0: i32) -> (i32, i32) {
    %c0_i32 = arith.constant 0 : i32
    %c0_i32_0 = arith.constant 0 : i32
    %c0_i32_1 = arith.constant 0 : i32
    return %c0_i32, %c0_i32_0 : i32, i32
  }
  func.func @transform_12(%arg0: i32) -> (i32, i32) {
    %c0_i32 = arith.constant 0 : i32
    %c0_i32_0 = arith.constant 0 : i32
    %c0_i32_1 = arith.constant 0 : i32
    return %c0_i32, %c0_i32_0 : i32, i32
  }
  func.func @transform_13(%arg0: i32) -> (i32, i32) {
    %c0_i32 = arith.constant 0 : i32
    %c0_i32_0 = arith.constant 0 : i32
    return %c0_i32, %arg0 : i32, i32
  }
}

</mosaic_0001>

<llo_original>
// kernel: tpu_custom_call.1
$region0: #{tpu_custom_call.1}
  #allocation0 [shape = 'u32[]', space=smem, size = 0x4, offset = 0x4, fixed_abs, tag = 'smem constant byte address 0x4 - core index']
  #allocation1 [shape = 'u32[144,128]{1,0:T(1,128)}', space=vmem, size = 0x12000, scoped, tag = 'internal scratch']
  %s0 = inlined_call_operand.vmem [shape: bf16[128,256], index: 0, kind: input, shape index: {}]
  %s1 = inlined_call_operand.vmem [shape: bf16[256,256], index: 1, kind: input, shape index: {}]
  %s2 = inlined_call_operand.vmem [shape: f32[256,1], index: 2, kind: input, shape index: {}]
  %s3 = inlined_call_operand.vmem [shape: bf16[256,256], index: 3, kind: input, shape index: {}]
  %s4 = inlined_call_operand.vmem [shape: f32[256,1], index: 4, kind: input, shape index: {}]
  %s5 = inlined_call_operand.vmem [shape: bf16[64,256], index: 5, kind: input, shape index: {}]
  %s6 = inlined_call_operand.vmem [shape: f32[64,1], index: 6, kind: input, shape index: {}]
  %s7 = inlined_call_operand.vmem [shape: bf16[448,64], index: 7, kind: input, shape index: {}]
  %s8 = inlined_call_operand.vmem [shape: f32[448,1], index: 8, kind: input, shape index: {}]
  %s9 = inlined_call_operand.vmem [shape: bf16[16,448], index: 9, kind: input, shape index: {}]
  %s10 = inlined_call_operand.vmem [shape: f32[16,1], index: 10, kind: input, shape index: {}]
  %s11 = inlined_call_operand.vmem [shape: bf16[8,16], index: 11, kind: input, shape index: {}]
  %s12 = inlined_call_operand.vmem [shape: f32[8,1], index: 12, kind: input, shape index: {}]
  %s13 = inlined_call_operand.hbm [shape: f32[8,128], index: 13, kind: output, shape index: {}]
  %s14 = sld [smem:[#allocation0]]
  $region62: #{tpu_custom_call.1} parent=0
    _
  %s16 = ssub.s32 1, %s14
  %s17 = scalar_select 0, %s16, %s14
  $region1: #{tpu_custom_call.1} parent=0
    #allocation2 [shape = 'u8[4096]{0}', space=vmem, size = 0x1000, scoped, tag = 'output window, operand 0, single buffered']
    #allocation3 [shape = 's32[1]{0}', space=sflag, size = 0x4, scoped, tag = 'scoped memory for tpu_custom_call.1']
    %18 = vsyncpa [#allocation3], 0
    // Predicated region
    $region2: #{tpu_custom_call.1} parent=1 // pred_check
      _
    $region3: #{tpu_custom_call.1} parent=1 // pred_check_branch
      %20 = sbr.rel (0) target = $region5
    $region4: #{tpu_custom_call.1} parent=1 // pred_region
      _
    $region5: #{tpu_custom_call.1} parent=1 // pred_fallthru
      _
    // Predicated region
    $region6: #{tpu_custom_call.1} parent=1 // pred_check
      _
    $region7: #{tpu_custom_call.1} parent=1 // pred_check_branch
      %22 = sbr.rel (0) target = $region9
    $region8: #{tpu_custom_call.1} parent=1 // pred_region
      _
    $region9: #{tpu_custom_call.1} parent=1 // pred_fallthru
      _
    // Predicated region
    $region10: #{tpu_custom_call.1} parent=1 // pred_check
      _
    $region11: #{tpu_custom_call.1} parent=1 // pred_check_branch
      %24 = sbr.rel (0) target = $region13
    $region12: #{tpu_custom_call.1} parent=1 // pred_region
      _
    $region13: #{tpu_custom_call.1} parent=1 // pred_fallthru
      _
    // Predicated region
    $region14: #{tpu_custom_call.1} parent=1 // pred_check
      _
    $region15: #{tpu_custom_call.1} parent=1 // pred_check_branch
      %26 = sbr.rel (0) target = $region17
    $region16: #{tpu_custom_call.1} parent=1 // pred_region
      _
    $region17: #{tpu_custom_call.1} parent=1 // pred_fallthru
      _
    // Predicated region
    $region18: #{tpu_custom_call.1} parent=1 // pred_check
      _
    $region19: #{tpu_custom_call.1} parent=1 // pred_check_branch
      %28 = sbr.rel (0) target = $region21
    $region20: #{tpu_custom_call.1} parent=1 // pred_region
      _
    $region21: #{tpu_custom_call.1} parent=1 // pred_fallthru
      _
    // Predicated region
    $region22: #{tpu_custom_call.1} parent=1 // pred_check
      _
    $region23: #{tpu_custom_call.1} parent=1 // pred_check_branch
      %30 = sbr.rel (0) target = $region25
    $region24: #{tpu_custom_call.1} parent=1 // pred_region
      _
    $region25: #{tpu_custom_call.1} parent=1 // pred_fallthru
      _
    // Predicated region
    $region26: #{tpu_custom_call.1} parent=1 // pred_check
      _
    $region27: #{tpu_custom_call.1} parent=1 // pred_check_branch
      %32 = sbr.rel (0) target = $region29
    $region28: #{tpu_custom_call.1} parent=1 // pred_region
      _
    $region29: #{tpu_custom_call.1} parent=1 // pred_fallthru
      _
    // Predicated region
    $region30: #{tpu_custom_call.1} parent=1 // pred_check
      _
    $region31: #{tpu_custom_call.1} parent=1 // pred_check_branch
      %34 = sbr.rel (0) target = $region33
    $region32: #{tpu_custom_call.1} parent=1 // pred_region
      _
    $region33: #{tpu_custom_call.1} parent=1 // pred_fallthru
      _
    // Predicated region
    $region34: #{tpu_custom_call.1} parent=1 // pred_check
      _
    $region35: #{tpu_custom_call.1} parent=1 // pred_check_branch
      %36 = sbr.rel (0) target = $region37
    $region36: #{tpu_custom_call.1} parent=1 // pred_region
      _
    $region37: #{tpu_custom_call.1} parent=1 // pred_fallthru
      _
    // Predicated region
    $region38: #{tpu_custom_call.1} parent=1 // pred_check
      _
    $region39: #{tpu_custom_call.1} parent=1 // pred_check_branch
      %38 = sbr.rel (0) target = $region41
    $region40: #{tpu_custom_call.1} parent=1 // pred_region
      _
    $region41: #{tpu_custom_call.1} parent=1 // pred_fallthru
      _
    // Predicated region
    $region42: #{tpu_custom_call.1} parent=1 // pred_check
      _
    $region43: #{tpu_custom_call.1} parent=1 // pred_check_branch
      %40 = sbr.rel (0) target = $region45
    $region44: #{tpu_custom_call.1} parent=1 // pred_region
      _
    $region45: #{tpu_custom_call.1} parent=1 // pred_fallthru
      _
    // Predicated region
    $region46: #{tpu_custom_call.1} parent=1 // pred_check
      _
    $region47: #{tpu_custom_call.1} parent=1 // pred_check_branch
      %42 = sbr.rel (0) target = $region49
    $region48: #{tpu_custom_call.1} parent=1 // pred_region
      _
    $region49: #{tpu_custom_call.1} parent=1 // pred_fallthru
      _
    // Predicated region
    $region50: #{tpu_custom_call.1} parent=1 // pred_check
      _
    $region51: #{tpu_custom_call.1} parent=1 // pred_check_branch
      %44 = sbr.rel (0) target = $region53
    $region52: #{tpu_custom_call.1} parent=1 // pred_region
      _
    $region53: #{tpu_custom_call.1} parent=1 // pred_fallthru
      _
    %v46 = vld [vmem:[%s0] sm:$0xff]
    %v47 = vld [vmem:[%s0 + $0x8] sm:$0xff]
    %v48 = vld [vmem:[%s0 + $0x10] sm:$0xff]
    %v49 = vld [vmem:[%s0 + $0x18] sm:$0xff]
    %v50 = vld [vmem:[%s0 + $0x20] sm:$0xff]
    %v51 = vld [vmem:[%s0 + $0x28] sm:$0xff]
    %v52 = vld [vmem:[%s0 + $0x30] sm:$0xff]
    %v53 = vld [vmem:[%s0 + $0x38] sm:$0xff]
    %v54 = vld [vmem:[%s0 + $0x40] sm:$0xff]
    %v55 = vld [vmem:[%s0 + $0x48] sm:$0xff]
    %v56 = vld [vmem:[%s0 + $0x50] sm:$0xff]
    %v57 = vld [vmem:[%s0 + $0x58] sm:$0xff]
    %v58 = vld [vmem:[%s0 + $0x60] sm:$0xff]
    %v59 = vld [vmem:[%s0 + $0x68] sm:$0xff]
    %v60 = vld [vmem:[%s0 + $0x70] sm:$0xff]
    %v61 = vld [vmem:[%s0 + $0x78] sm:$0xff]
    %v62 = vld [vmem:[%s1] sm:$0xff]
    %v63 = vld [vmem:[%s1 + $0x8] sm:$0xff]
    %v64 = vld [vmem:[%s1 + $0x10] sm:$0xff]
    %v65 = vld [vmem:[%s1 + $0x18] sm:$0xff]
    %v66 = vld [vmem:[%s1 + $0x20] sm:$0xff]
    %v67 = vld [vmem:[%s1 + $0x28] sm:$0xff]
    %v68 = vld [vmem:[%s1 + $0x30] sm:$0xff]
    %v69 = vld [vmem:[%s1 + $0x38] sm:$0xff]
    %v70 = vld [vmem:[%s1 + $0x40] sm:$0xff]
    %v71 = vld [vmem:[%s1 + $0x48] sm:$0xff]
    %v72 = vld [vmem:[%s1 + $0x50] sm:$0xff]
    %v73 = vld [vmem:[%s1 + $0x58] sm:$0xff]
    %v74 = vld [vmem:[%s1 + $0x60] sm:$0xff]
    %v75 = vld [vmem:[%s1 + $0x68] sm:$0xff]
    %v76 = vld [vmem:[%s1 + $0x70] sm:$0xff]
    %v77 = vld [vmem:[%s1 + $0x78] sm:$0xff]
    %v78 = vld [vmem:[%s1 + $0x80] sm:$0xff]
    %v79 = vld [vmem:[%s1 + $0x88] sm:$0xff]
    %v80 = vld [vmem:[%s1 + $0x90] sm:$0xff]
    %v81 = vld [vmem:[%s1 + $0x98] sm:$0xff]
    %v82 = vld [vmem:[%s1 + $0xa0] sm:$0xff]
    %v83 = vld [vmem:[%s1 + $0xa8] sm:$0xff]
    %v84 = vld [vmem:[%s1 + $0xb0] sm:$0xff]
    %v85 = vld [vmem:[%s1 + $0xb8] sm:$0xff]
    %v86 = vld [vmem:[%s1 + $0xc0] sm:$0xff]
    %v87 = vld [vmem:[%s1 + $0xc8] sm:$0xff]
    %v88 = vld [vmem:[%s1 + $0xd0] sm:$0xff]
    %v89 = vld [vmem:[%s1 + $0xd8] sm:$0xff]
    %v90 = vld [vmem:[%s1 + $0xe0] sm:$0xff]
    %v91 = vld [vmem:[%s1 + $0xe8] sm:$0xff]
    %v92 = vld [vmem:[%s1 + $0xf0] sm:$0xff]
    %v93 = vld [vmem:[%s1 + $0xf8] sm:$0xff]
    %v94 = vld [vmem:[%s2] sm:$0xff]
    %v95 = vld [vmem:[%s2 + $0x8] sm:$0xff]
    %v96 = vld [vmem:[%s2 + $0x10] sm:$0xff]
    %v97 = vld [vmem:[%s2 + $0x18] sm:$0xff]
    %v98 = vld [vmem:[%s2 + $0x20] sm:$0xff]
    %v99 = vld [vmem:[%s2 + $0x28] sm:$0xff]
    %v100 = vld [vmem:[%s2 + $0x30] sm:$0xff]
    %v101 = vld [vmem:[%s2 + $0x38] sm:$0xff]
    %v102 = vld [vmem:[%s2 + $0x40] sm:$0xff]
    %v103 = vld [vmem:[%s2 + $0x48] sm:$0xff]
    %v104 = vld [vmem:[%s2 + $0x50] sm:$0xff]
    %v105 = vld [vmem:[%s2 + $0x58] sm:$0xff]
    %v106 = vld [vmem:[%s2 + $0x60] sm:$0xff]
    %v107 = vld [vmem:[%s2 + $0x68] sm:$0xff]
    %v108 = vld [vmem:[%s2 + $0x70] sm:$0xff]
    %v109 = vld [vmem:[%s2 + $0x78] sm:$0xff]
    %v110 = vld [vmem:[%s2 + $0x80] sm:$0xff]
    %v111 = vld [vmem:[%s2 + $0x88] sm:$0xff]
    %v112 = vld [vmem:[%s2 + $0x90] sm:$0xff]
    %v113 = vld [vmem:[%s2 + $0x98] sm:$0xff]
    %v114 = vld [vmem:[%s2 + $0xa0] sm:$0xff]
    %v115 = vld [vmem:[%s2 + $0xa8] sm:$0xff]
    %v116 = vld [vmem:[%s2 + $0xb0] sm:$0xff]
    %v117 = vld [vmem:[%s2 + $0xb8] sm:$0xff]
    %v118 = vld [vmem:[%s2 + $0xc0] sm:$0xff]
    %v119 = vld [vmem:[%s2 + $0xc8] sm:$0xff]
    %v120 = vld [vmem:[%s2 + $0xd0] sm:$0xff]
    %v121 = vld [vmem:[%s2 + $0xd8] sm:$0xff]
    %v122 = vld [vmem:[%s2 + $0xe0] sm:$0xff]
    %v123 = vld [vmem:[%s2 + $0xe8] sm:$0xff]
    %v124 = vld [vmem:[%s2 + $0xf0] sm:$0xff]
    %v125 = vld [vmem:[%s2 + $0xf8] sm:$0xff]
    %127 = vset.pattern.permute.xlu0 0
    %128 = vperm.xlu0 %127, %v94
    %v129 = vpop.permute.xlu0 %128
    %132 = vset.pattern.permute.xlu0 0
    %133 = vperm.xlu0 %132, %v95
    %v134 = vpop.permute.xlu0 %133
    %137 = vset.pattern.permute.xlu0 0
    %138 = vperm.xlu0 %137, %v96
    %v139 = vpop.permute.xlu0 %138
    %142 = vset.pattern.permute.xlu0 0
    %143 = vperm.xlu0 %142, %v97
    %v144 = vpop.permute.xlu0 %143
    %147 = vset.pattern.permute.xlu0 0
    %148 = vperm.xlu0 %147, %v98
    %v149 = vpop.permute.xlu0 %148
    %152 = vset.pattern.permute.xlu0 0
    %153 = vperm.xlu0 %152, %v99
    %v154 = vpop.permute.xlu0 %153
    %157 = vset.pattern.permute.xlu0 0
    %158 = vperm.xlu0 %157, %v100
    %v159 = vpop.permute.xlu0 %158
    %162 = vset.pattern.permute.xlu0 0
    %163 = vperm.xlu0 %162, %v101
    %v164 = vpop.permute.xlu0 %163
    %167 = vset.pattern.permute.xlu0 0
    %168 = vperm.xlu0 %167, %v102
    %v169 = vpop.permute.xlu0 %168
    %172 = vset.pattern.permute.xlu0 0
    %173 = vperm.xlu0 %172, %v103
    %v174 = vpop.permute.xlu0 %173
    %177 = vset.pattern.permute.xlu0 0
    %178 = vperm.xlu0 %177, %v104
    %v179 = vpop.permute.xlu0 %178
    %182 = vset.pattern.permute.xlu0 0
    %183 = vperm.xlu0 %182, %v105
    %v184 = vpop.permute.xlu0 %183
    %187 = vset.pattern.permute.xlu0 0
    %188 = vperm.xlu0 %187, %v106
    %v189 = vpop.permute.xlu0 %188
    %192 = vset.pattern.permute.xlu0 0
    %193 = vperm.xlu0 %192, %v107
    %v194 = vpop.permute.xlu0 %193
    %197 = vset.pattern.permute.xlu0 0
    %198 = vperm.xlu0 %197, %v108
    %v199 = vpop.permute.xlu0 %198
    %202 = vset.pattern.permute.xlu0 0
    %203 = vperm.xlu0 %202, %v109
    %v204 = vpop.permute.xlu0 %203
    %207 = vset.pattern.permute.xlu0 0
    %208 = vperm.xlu0 %207, %v110
    %v209 = vpop.permute.xlu0 %208
    %212 = vset.pattern.permute.xlu0 0
    %213 = vperm.xlu0 %212, %v111
    %v214 = vpop.permute.xlu0 %213
    %217 = vset.pattern.permute.xlu0 0
    %218 = vperm.xlu0 %217, %v112
    %v219 = vpop.permute.xlu0 %218
    %222 = vset.pattern.permute.xlu0 0
    %223 = vperm.xlu0 %222, %v113
    %v224 = vpop.permute.xlu0 %223
    %227 = vset.pattern.permute.xlu0 0
    %228 = vperm.xlu0 %227, %v114
    %v229 = vpop.permute.xlu0 %228
    %232 = vset.pattern.permute.xlu0 0
    %233 = vperm.xlu0 %232, %v115
    %v234 = vpop.permute.xlu0 %233
    %237 = vset.pattern.permute.xlu0 0
    %238 = vperm.xlu0 %237, %v116
    %v239 = vpop.permute.xlu0 %238
    %242 = vset.pattern.permute.xlu0 0
    %243 = vperm.xlu0 %242, %v117
    %v244 = vpop.permute.xlu0 %243
    %247 = vset.pattern.permute.xlu0 0
    %248 = vperm.xlu0 %247, %v118
    %v249 = vpop.permute.xlu0 %248
    %252 = vset.pattern.permute.xlu0 0
    %253 = vperm.xlu0 %252, %v119
    %v254 = vpop.permute.xlu0 %253
    %257 = vset.pattern.permute.xlu0 0
    %258 = vperm.xlu0 %257, %v120
    %v259 = vpop.permute.xlu0 %258
    %262 = vset.pattern.permute.xlu0 0
    %263 = vperm.xlu0 %262, %v121
    %v264 = vpop.permute.xlu0 %263
    %267 = vset.pattern.permute.xlu0 0
    %268 = vperm.xlu0 %267, %v122
    %v269 = vpop.permute.xlu0 %268
    %272 = vset.pattern.permute.xlu0 0
    %273 = vperm.xlu0 %272, %v123
    %v274 = vpop.permute.xlu0 %273
    %277 = vset.pattern.permute.xlu0 0
    %278 = vperm.xlu0 %277, %v124
    %v279 = vpop.permute.xlu0 %278
    %282 = vset.pattern.permute.xlu0 0
    %283 = vperm.xlu0 %282, %v125
    %v284 = vpop.permute.xlu0 %283
    %v318 = vunpack.c.l.b16 %v62
    %v319 = vunpack.c.h.b16 %v62
    %v320 = vunpack.c.l.b16 %v63
    %v321 = vunpack.c.h.b16 %v63
    %v322 = vunpack.c.l.b16 %v64
    %v323 = vunpack.c.h.b16 %v64
    %v324 = vunpack.c.l.b16 %v65
    %v325 = vunpack.c.h.b16 %v65
    %v326 = vunpack.c.l.b16 %v66
    %v327 = vunpack.c.h.b16 %v66
    %v328 = vunpack.c.l.b16 %v67
    %v329 = vunpack.c.h.b16 %v67
    %v330 = vunpack.c.l.b16 %v68
    %v331 = vunpack.c.h.b16 %v68
    %v332 = vunpack.c.l.b16 %v69
    %v333 = vunpack.c.h.b16 %v69
    %v334 = vunpack.c.l.b16 %v70
    %v335 = vunpack.c.h.b16 %v70
    %v336 = vunpack.c.l.b16 %v71
    %v337 = vunpack.c.h.b16 %v71
    %v338 = vunpack.c.l.b16 %v72
    %v339 = vunpack.c.h.b16 %v72
    %v340 = vunpack.c.l.b16 %v73
    %v341 = vunpack.c.h.b16 %v73
    %v342 = vunpack.c.l.b16 %v74
    %v343 = vunpack.c.h.b16 %v74
    %v344 = vunpack.c.l.b16 %v75
    %v345 = vunpack.c.h.b16 %v75
    %v346 = vunpack.c.l.b16 %v76
    %v347 = vunpack.c.h.b16 %v76
    %v348 = vunpack.c.l.b16 %v77
    %v349 = vunpack.c.h.b16 %v77
    %v350 = vunpack.c.l.b16 %v78
    %v351 = vunpack.c.h.b16 %v78
    %v352 = vunpack.c.l.b16 %v79
    %v353 = vunpack.c.h.b16 %v79
    %v354 = vunpack.c.l.b16 %v80
    %v355 = vunpack.c.h.b16 %v80
    %v356 = vunpack.c.l.b16 %v81
    %v357 = vunpack.c.h.b16 %v81
    %v358 = vunpack.c.l.b16 %v82
    %v359 = vunpack.c.h.b16 %v82
    %v360 = vunpack.c.l.b16 %v83
    %v361 = vunpack.c.h.b16 %v83
    %v362 = vunpack.c.l.b16 %v84
    %v363 = vunpack.c.h.b16 %v84
    %v364 = vunpack.c.l.b16 %v85
    %v365 = vunpack.c.h.b16 %v85
    %v366 = vunpack.c.l.b16 %v86
    %v367 = vunpack.c.h.b16 %v86
    %v368 = vunpack.c.l.b16 %v87
    %v369 = vunpack.c.h.b16 %v87
    %v370 = vunpack.c.l.b16 %v88
    %v371 = vunpack.c.h.b16 %v88
    %v372 = vunpack.c.l.b16 %v89
    %v373 = vunpack.c.h.b16 %v89
    %v374 = vunpack.c.l.b16 %v90
    %v375 = vunpack.c.h.b16 %v90
    %v376 = vunpack.c.l.b16 %v91
    %v377 = vunpack.c.h.b16 %v91
    %v378 = vunpack.c.l.b16 %v92
    %v379 = vunpack.c.h.b16 %v92
    %v380 = vunpack.c.l.b16 %v93
    %v381 = vunpack.c.h.b16 %v93
    %v382 = vpack.c.b16 %v320, %v318
    %v383 = vpack.c.b16 %v321, %v319
    %v384 = vpack.c.b16 %v324, %v322
    %v385 = vpack.c.b16 %v325, %v323
    %v386 = vpack.c.b16 %v328, %v326
    %v387 = vpack.c.b16 %v329, %v327
    %v388 = vpack.c.b16 %v332, %v330
    %v389 = vpack.c.b16 %v333, %v331
    %v390 = vpack.c.b16 %v336, %v334
    %v391 = vpack.c.b16 %v337, %v335
    %v392 = vpack.c.b16 %v340, %v338
    %v393 = vpack.c.b16 %v341, %v339
    %v394 = vpack.c.b16 %v344, %v342
    %v395 = vpack.c.b16 %v345, %v343
    %v396 = vpack.c.b16 %v348, %v346
    %v397 = vpack.c.b16 %v349, %v347
    %v398 = vpack.c.b16 %v352, %v350
    %v399 = vpack.c.b16 %v353, %v351
    %v400 = vpack.c.b16 %v356, %v354
    %v401 = vpack.c.b16 %v357, %v355
    %v402 = vpack.c.b16 %v360, %v358
    %v403 = vpack.c.b16 %v361, %v359
    %v404 = vpack.c.b16 %v364, %v362
    %v405 = vpack.c.b16 %v365, %v363
    %v406 = vpack.c.b16 %v368, %v366
    %v407 = vpack.c.b16 %v369, %v367
    %v408 = vpack.c.b16 %v372, %v370
    %v409 = vpack.c.b16 %v373, %v371
    %v410 = vpack.c.b16 %v376, %v374
    %v411 = vpack.c.b16 %v377, %v375
    %v412 = vpack.c.b16 %v380, %v378
    %v413 = vpack.c.b16 %v381, %v379
    %v462 = vunpack.c.l.b16 %v46
    %v463 = vunpack.c.h.b16 %v46
    %v464 = vunpack.c.l.b16 %v47
    %v465 = vunpack.c.h.b16 %v47
    %v466 = vunpack.c.l.b16 %v48
    %v467 = vunpack.c.h.b16 %v48
    %v468 = vunpack.c.l.b16 %v49
    %v469 = vunpack.c.h.b16 %v49
    %v470 = vunpack.c.l.b16 %v50
    %v471 = vunpack.c.h.b16 %v50
    %v472 = vunpack.c.l.b16 %v51
    %v473 = vunpack.c.h.b16 %v51
    %v474 = vunpack.c.l.b16 %v52
    %v475 = vunpack.c.h.b16 %v52
    %v476 = vunpack.c.l.b16 %v53
    %v477 = vunpack.c.h.b16 %v53
    %v478 = vunpack.c.l.b16 %v54
    %v479 = vunpack.c.h.b16 %v54
    %v480 = vunpack.c.l.b16 %v55
    %v481 = vunpack.c.h.b16 %v55
    %v482 = vunpack.c.l.b16 %v56
    %v483 = vunpack.c.h.b16 %v56
    %v484 = vunpack.c.l.b16 %v57
    %v485 = vunpack.c.h.b16 %v57
    %v486 = vunpack.c.l.b16 %v58
    %v487 = vunpack.c.h.b16 %v58
    %v488 = vunpack.c.l.b16 %v59
    %v489 = vunpack.c.h.b16 %v59
    %v490 = vunpack.c.l.b16 %v60
    %v491 = vunpack.c.h.b16 %v60
    %v492 = vunpack.c.l.b16 %v61
    %v493 = vunpack.c.h.b16 %v61
    %v494 = vpack.c.b16 %v464, %v462
    %v495 = vpack.c.b16 %v465, %v463
    %v496 = vpack.c.b16 %v468, %v466
    %v497 = vpack.c.b16 %v469, %v467
    %v498 = vpack.c.b16 %v472, %v470
    %v499 = vpack.c.b16 %v473, %v471
    %v500 = vpack.c.b16 %v476, %v474
    %v501 = vpack.c.b16 %v477, %v475
    %v502 = vpack.c.b16 %v480, %v478
    %v503 = vpack.c.b16 %v481, %v479
    %v504 = vpack.c.b16 %v484, %v482
    %v505 = vpack.c.b16 %v485, %v483
    %v506 = vpack.c.b16 %v488, %v486
    %v507 = vpack.c.b16 %v489, %v487
    %v508 = vpack.c.b16 %v492, %v490
    %v509 = vpack.c.b16 %v493, %v491
    %526 = vmatprep.subr.bf16.mxu0 %v495
    %527 = vmatpush1.bf16.xpose.msra.mxu0 %v494
    %528 = vmatprep.subr.bf16.mxu0 %v497
    %529 = vmatpush1.bf16.xpose.msra.mxu0 %v496
    %530 = vmatprep.subr.bf16.mxu0 %v499
    %531 = vmatpush1.bf16.xpose.msra.mxu0 %v498
    %532 = vmatprep.subr.bf16.mxu0 %v501
    %533 = vmatpush1.bf16.xpose.msra.mxu0 %v500
    %534 = vmatprep.subr.bf16.mxu0 %v503
    %535 = vmatpush1.bf16.xpose.msra.mxu0 %v502
    %536 = vmatprep.subr.bf16.mxu0 %v505
    %537 = vmatpush1.bf16.xpose.msra.mxu0 %v504
    %538 = vmatprep.subr.bf16.mxu0 %v507
    %539 = vmatpush1.bf16.xpose.msra.mxu0 %v506
    %540 = vmatprep.subr.bf16.mxu0 %v509
    %541 = vmatpush1.bf16.xpose.msra.mxu0 %v508
    %542 = vmatprep.subr.bf16.mxu0 0
    %543 = vmatpush1.bf16.xpose.msra.mxu0 0
    %544 = vmatprep.subr.bf16.mxu0 0
    %545 = vmatpush1.bf16.xpose.msra.mxu0 0
    %546 = vmatprep.subr.bf16.mxu0 0
    %547 = vmatpush1.bf16.xpose.msra.mxu0 0
    %548 = vmatprep.subr.bf16.mxu0 0
    %549 = vmatpush1.bf16.xpose.msra.mxu0 0
    %550 = vmatprep.subr.bf16.mxu0 0
    %551 = vmatpush1.bf16.xpose.msra.mxu0 0
    %552 = vmatprep.subr.bf16.mxu0 0
    %553 = vmatpush1.bf16.xpose.msra.mxu0 0
    %554 = vmatprep.subr.bf16.mxu0 0
    %555 = vmatpush1.bf16.xpose.msra.mxu0 0
    %556 = vmatprep.subr.bf16.mxu0 0
    %557 = vmatpush1.bf16.xpose.msra.mxu0 0
    %558 = vmatprep.mubr.bf16.mxu0 %v383
    %559 = vmatmul.mubr.bf16.gmra.mrb[0].mxu0 %v382
    %v560 = vpop.f32.mrb[0].mxu0
    %v561 = vadd.f32 %v129, %v560
    %v562 = vpop.f32.mrb[0].mxu0
    %v563 = vpop.f32.mrb[0].mxu0
    %v564 = vadd.f32 %v134, %v563
    %v565 = vpop.f32.mrb[0].mxu0
    %566 = vmatprep.mubr.bf16.mxu0 %v385
    %567 = vmatmul.mubr.bf16.gmra.mrb[0].mxu0 %v384
    %v568 = vpop.f32.mrb[0].mxu0
    %v569 = vadd.f32 %v139, %v568
    %v570 = vpop.f32.mrb[0].mxu0
    %v571 = vpop.f32.mrb[0].mxu0
    %v572 = vadd.f32 %v144, %v571
    %v573 = vpop.f32.mrb[0].mxu0
    %574 = vmatprep.mubr.bf16.mxu0 %v387
    %575 = vmatmul.mubr.bf16.gmra.mrb[0].mxu0 %v386
    %v576 = vpop.f32.mrb[0].mxu0
    %v577 = vadd.f32 %v149, %v576
    %v578 = vpop.f32.mrb[0].mxu0
    %v579 = vpop.f32.mrb[0].mxu0
    %v580 = vadd.f32 %v154, %v579
    %v581 = vpop.f32.mrb[0].mxu0
    %582 = vmatprep.mubr.bf16.mxu0 %v389
    %583 = vmatmul.mubr.bf16.gmra.mrb[0].mxu0 %v388
    %v584 = vpop.f32.mrb[0].mxu0
    %v585 = vadd.f32 %v159, %v584
    %v586 = vpop.f32.mrb[0].mxu0
    %v587 = vpop.f32.mrb[0].mxu0
    %v588 = vadd.f32 %v164, %v587
    %v589 = vpop.f32.mrb[0].mxu0
    %590 = vmatprep.mubr.bf16.mxu0 %v391
    %591 = vmatmul.mubr.bf16.gmra.mrb[0].mxu0 %v390
    %v592 = vpop.f32.mrb[0].mxu0
    %v593 = vadd.f32 %v169, %v592
    %v594 = vpop.f32.mrb[0].mxu0
    %v595 = vpop.f32.mrb[0].mxu0
    %v596 = vadd.f32 %v174, %v595
    %v597 = vpop.f32.mrb[0].mxu0
    %598 = vmatprep.mubr.bf16.mxu0 %v393
    %599 = vmatmul.mubr.bf16.gmra.mrb[0].mxu0 %v392
    %v600 = vpop.f32.mrb[0].mxu0
    %v601 = vadd.f32 %v179, %v600
    %v602 = vpop.f32.mrb[0].mxu0
    %v603 = vpop.f32.mrb[0].mxu0
    %v604 = vadd.f32 %v184, %v603
    %v605 = vpop.f32.mrb[0].mxu0
    %606 = vmatprep.mubr.bf16.mxu0 %v395
    %607 = vmatmul.mubr.bf16.gmra.mrb[0].mxu0 %v394
    %v608 = vpop.f32.mrb[0].mxu0
    %v609 = vadd.f32 %v189, %v608
    %v610 = vpop.f32.mrb[0].mxu0
    %v611 = vpop.f32.mrb[0].mxu0
    %v612 = vadd.f32 %v194, %v611
    %v613 = vpop.f32.mrb[0].mxu0
    %614 = vmatprep.mubr.bf16.mxu0 %v397
    %615 = vmatmul.mubr.bf16.gmra.mrb[0].mxu0 %v396
    %v616 = vpop.f32.mrb[0].mxu0
    %v617 = vadd.f32 %v199, %v616
    %v618 = vpop.f32.mrb[0].mxu0
    %v619 = vpop.f32.mrb[0].mxu0
    %v620 = vadd.f32 %v204, %v619
    %v621 = vpop.f32.mrb[0].mxu0
    %622 = vmatprep.mubr.bf16.mxu0 %v399
    %623 = vmatmul.mubr.bf16.gmra.mrb[0].mxu0 %v398
    %v624 = vpop.f32.mrb[0].mxu0
    %v625 = vadd.f32 %v209, %v624
    %v626 = vpop.f32.mrb[0].mxu0
    %v627 = vpop.f32.mrb[0].mxu0
    %v628 = vadd.f32 %v214, %v627
    %v629 = vpop.f32.mrb[0].mxu0
    %630 = vmatprep.mubr.bf16.mxu0 %v401
    %631 = vmatmul.mubr.bf16.gmra.mrb[0].mxu0 %v400
    %v632 = vpop.f32.mrb[0].mxu0
    %v633 = vadd.f32 %v219, %v632
    %v634 = vpop.f32.mrb[0].mxu0
    %v635 = vpop.f32.mrb[0].mxu0
    %v636 = vadd.f32 %v224, %v635
    %v637 = vpop.f32.mrb[0].mxu0
    %638 = vmatprep.mubr.bf16.mxu0 %v403
    %639 = vmatmul.mubr.bf16.gmra.mrb[0].mxu0 %v402
    %v640 = vpop.f32.mrb[0].mxu0
    %v641 = vadd.f32 %v229, %v640
    %v642 = vpop.f32.mrb[0].mxu0
    %v643 = vpop.f32.mrb[0].mxu0
    %v644 = vadd.f32 %v234, %v643
    %v645 = vpop.f32.mrb[0].mxu0
    %646 = vmatprep.mubr.bf16.mxu0 %v405
    %647 = vmatmul.mubr.bf16.gmra.mrb[0].mxu0 %v404
    %v648 = vpop.f32.mrb[0].mxu0
    %v649 = vadd.f32 %v239, %v648
    %v650 = vpop.f32.mrb[0].mxu0
    %v651 = vpop.f32.mrb[0].mxu0
    %v652 = vadd.f32 %v244, %v651
    %v653 = vpop.f32.mrb[0].mxu0
    %654 = vmatprep.mubr.bf16.mxu0 %v407
    %655 = vmatmul.mubr.bf16.gmra.mrb[0].mxu0 %v406
    %v656 = vpop.f32.mrb[0].mxu0
    %v657 = vadd.f32 %v249, %v656
    %v658 = vpop.f32.mrb[0].mxu0
    %v659 = vpop.f32.mrb[0].mxu0
    %v660 = vadd.f32 %v254, %v659
    %v661 = vpop.f32.mrb[0].mxu0
    %662 = vmatprep.mubr.bf16.mxu0 %v409
    %663 = vmatmul.mubr.bf16.gmra.mrb[0].mxu0 %v408
    %v664 = vpop.f32.mrb[0].mxu0
    %v665 = vadd.f32 %v259, %v664
    %v666 = vpop.f32.mrb[0].mxu0
    %v667 = vpop.f32.mrb[0].mxu0
    %v668 = vadd.f32 %v264, %v667
    %v669 = vpop.f32.mrb[0].mxu0
    %670 = vmatprep.mubr.bf16.mxu0 %v411
    %671 = vmatmul.mubr.bf16.gmra.mrb[0].mxu0 %v410
    %v672 = vpop.f32.mrb[0].mxu0
    %v673 = vadd.f32 %v269, %v672
    %v674 = vpop.f32.mrb[0].mxu0
    %v675 = vpop.f32.mrb[0].mxu0
    %v676 = vadd.f32 %v274, %v675
    %v677 = vpop.f32.mrb[0].mxu0
    %678 = vmatprep.mubr.bf16.mxu0 %v413
    %679 = vmatmul.mubr.bf16.gmra.mrb[0].mxu0 %v412
    %v680 = vpop.f32.mrb[0].mxu0
    %v681 = vadd.f32 %v279, %v680
    %v682 = vpop.f32.mrb[0].mxu0
    %v683 = vpop.f32.mrb[0].mxu0
    %v684 = vadd.f32 %v284, %v683
    %v685 = vpop.f32.mrb[0].mxu0
    %686 = vdwg.mxu0
    %v687 = vmax.f32 %v561, 0.0
    %v688 = vmax.f32 %v564, 0.0
    %v689 = vmax.f32 %v569, 0.0
    %v690 = vmax.f32 %v572, 0.0
    %v691 = vmax.f32 %v577, 0.0
    %v692 = vmax.f32 %v580, 0.0
    %v693 = vmax.f32 %v585, 0.0
    %v694 = vmax.f32 %v588, 0.0
    %v695 = vmax.f32 %v593, 0.0
    %v696 = vmax.f32 %v596, 0.0
    %v697 = vmax.f32 %v601, 0.0
    %v698 = vmax.f32 %v604, 0.0
    %v699 = vmax.f32 %v609, 0.0
    %v700 = vmax.f32 %v612, 0.0
    %v701 = vmax.f32 %v617, 0.0
    %v702 = vmax.f32 %v620, 0.0
    %v703 = vmax.f32 %v625, 0.0
    %v704 = vmax.f32 %v628, 0.0
    %v705 = vmax.f32 %v633, 0.0
    %v706 = vmax.f32 %v636, 0.0
    %v707 = vmax.f32 %v641, 0.0
    %v708 = vmax.f32 %v644, 0.0
    %v709 = vmax.f32 %v649, 0.0
    %v710 = vmax.f32 %v652, 0.0
    %v711 = vmax.f32 %v657, 0.0
    %v712 = vmax.f32 %v660, 0.0
    %v713 = vmax.f32 %v665, 0.0
    %v714 = vmax.f32 %v668, 0.0
    %v715 = vmax.f32 %v673, 0.0
    %v716 = vmax.f32 %v676, 0.0
    %v717 = vmax.f32 %v681, 0.0
    %v718 = vmax.f32 %v684, 0.0
    %v719 = vpack.c.bf16 %v688, %v687
    %v720 = vpack.c.bf16 %v690, %v689
    %v721 = vpack.c.bf16 %v692, %v691
    %v722 = vpack.c.bf16 %v694, %v693
    %v723 = vpack.c.bf16 %v696, %v695
    %v724 = vpack.c.bf16 %v698, %v697
    %v725 = vpack.c.bf16 %v700, %v699
    %v726 = vpack.c.bf16 %v702, %v701
    %v727 = vpack.c.bf16 %v704, %v703
    %v728 = vpack.c.bf16 %v706, %v705
    %v729 = vpack.c.bf16 %v708, %v707
    %v730 = vpack.c.bf16 %v710, %v709
    %v731 = vpack.c.bf16 %v712, %v711
    %v732 = vpack.c.bf16 %v714, %v713
    %v733 = vpack.c.bf16 %v716, %v715
    %v734 = vpack.c.bf16 %v718, %v717
    %v735 = vld [vmem:[%s3] sm:$0xff]
    %v736 = vld [vmem:[%s3 + $0x8] sm:$0xff]
    %v737 = vld [vmem:[%s3 + $0x10] sm:$0xff]
    %v738 = vld [vmem:[%s3 + $0x18] sm:$0xff]
    %v739 = vld [vmem:[%s3 + $0x20] sm:$0xff]
    %v740 = vld [vmem:[%s3 + $0x28] sm:$0xff]
    %v741 = vld [vmem:[%s3 + $0x30] sm:$0xff]
    %v742 = vld [vmem:[%s3 + $0x38] sm:$0xff]
    %v743 = vld [vmem:[%s3 + $0x40] sm:$0xff]
    %v744 = vld [vmem:[%s3 + $0x48] sm:$0xff]
    %v745 = vld [vmem:[%s3 + $0x50] sm:$0xff]
    %v746 = vld [vmem:[%s3 + $0x58] sm:$0xff]
    %v747 = vld [vmem:[%s3 + $0x60] sm:$0xff]
    %v748 = vld [vmem:[%s3 + $0x68] sm:$0xff]
    %v749 = vld [vmem:[%s3 + $0x70] sm:$0xff]
    %v750 = vld [vmem:[%s3 + $0x78] sm:$0xff]
    %v751 = vld [vmem:[%s3 + $0x80] sm:$0xff]
    %v752 = vld [vmem:[%s3 + $0x88] sm:$0xff]
    %v753 = vld [vmem:[%s3 + $0x90] sm:$0xff]
    %v754 = vld [vmem:[%s3 + $0x98] sm:$0xff]
    %v755 = vld [vmem:[%s3 + $0xa0] sm:$0xff]
    %v756 = vld [vmem:[%s3 + $0xa8] sm:$0xff]
    %v757 = vld [vmem:[%s3 + $0xb0] sm:$0xff]
    %v758 = vld [vmem:[%s3 + $0xb8] sm:$0xff]
    %v759 = vld [vmem:[%s3 + $0xc0] sm:$0xff]
    %v760 = vld [vmem:[%s3 + $0xc8] sm:$0xff]
    %v761 = vld [vmem:[%s3 + $0xd0] sm:$0xff]
    %v762 = vld [vmem:[%s3 + $0xd8] sm:$0xff]
    %v763 = vld [vmem:[%s3 + $0xe0] sm:$0xff]
    %v764 = vld [vmem:[%s3 + $0xe8] sm:$0xff]
    %v765 = vld [vmem:[%s3 + $0xf0] sm:$0xff]
    %v766 = vld [vmem:[%s3 + $0xf8] sm:$0xff]
    %v767 = vld [vmem:[%s4] sm:$0xff]
    %v768 = vld [vmem:[%s4 + $0x8] sm:$0xff]
    %v769 = vld [vmem:[%s4 + $0x10] sm:$0xff]
    %v770 = vld [vmem:[%s4 + $0x18] sm:$0xff]
    %v771 = vld [vmem:[%s4 + $0x20] sm:$0xff]
    %v772 = vld [vmem:[%s4 + $0x28] sm:$0xff]
    %v773 = vld [vmem:[%s4 + $0x30] sm:$0xff]
    %v774 = vld [vmem:[%s4 + $0x38] sm:$0xff]
    %v775 = vld [vmem:[%s4 + $0x40] sm:$0xff]
    %v776 = vld [vmem:[%s4 + $0x48] sm:$0xff]
    %v777 = vld [vmem:[%s4 + $0x50] sm:$0xff]
    %v778 = vld [vmem:[%s4 + $0x58] sm:$0xff]
    %v779 = vld [vmem:[%s4 + $0x60] sm:$0xff]
    %v780 = vld [vmem:[%s4 + $0x68] sm:$0xff]
    %v781 = vld [vmem:[%s4 + $0x70] sm:$0xff]
    %v782 = vld [vmem:[%s4 + $0x78] sm:$0xff]
    %v783 = vld [vmem:[%s4 + $0x80] sm:$0xff]
    %v784 = vld [vmem:[%s4 + $0x88] sm:$0xff]
    %v785 = vld [vmem:[%s4 + $0x90] sm:$0xff]
    %v786 = vld [vmem:[%s4 + $0x98] sm:$0xff]
    %v787 = vld [vmem:[%s4 + $0xa0] sm:$0xff]
    %v788 = vld [vmem:[%s4 + $0xa8] sm:$0xff]
    %v789 = vld [vmem:[%s4 + $0xb0] sm:$0xff]
    %v790 = vld [vmem:[%s4 + $0xb8] sm:$0xff]
    %v791 = vld [vmem:[%s4 + $0xc0] sm:$0xff]
    %v792 = vld [vmem:[%s4 + $0xc8] sm:$0xff]
    %v793 = vld [vmem:[%s4 + $0xd0] sm:$0xff]
    %v794 = vld [vmem:[%s4 + $0xd8] sm:$0xff]
    %v795 = vld [vmem:[%s4 + $0xe0] sm:$0xff]
    %v796 = vld [vmem:[%s4 + $0xe8] sm:$0xff]
    %v797 = vld [vmem:[%s4 + $0xf0] sm:$0xff]
    %v798 = vld [vmem:[%s4 + $0xf8] sm:$0xff]
    %800 = vset.pattern.permute.xlu0 0
    %801 = vperm.xlu0 %800, %v767
    %v802 = vpop.permute.xlu0 %801
    %805 = vset.pattern.permute.xlu0 0
    %806 = vperm.xlu0 %805, %v768
    %v807 = vpop.permute.xlu0 %806
    %810 = vset.pattern.permute.xlu0 0
    %811 = vperm.xlu0 %810, %v769
    %v812 = vpop.permute.xlu0 %811
    %815 = vset.pattern.permute.xlu0 0
    %816 = vperm.xlu0 %815, %v770
    %v817 = vpop.permute.xlu0 %816
    %820 = vset.pattern.permute.xlu0 0
    %821 = vperm.xlu0 %820, %v771
    %v822 = vpop.permute.xlu0 %821
    %825 = vset.pattern.permute.xlu0 0
    %826 = vperm.xlu0 %825, %v772
    %v827 = vpop.permute.xlu0 %826
    %830 = vset.pattern.permute.xlu0 0
    %831 = vperm.xlu0 %830, %v773
    %v832 = vpop.permute.xlu0 %831
    %835 = vset.pattern.permute.xlu0 0
    %836 = vperm.xlu0 %835, %v774
    %v837 = vpop.permute.xlu0 %836
    %840 = vset.pattern.permute.xlu0 0
    %841 = vperm.xlu0 %840, %v775
    %v842 = vpop.permute.xlu0 %841
    %845 = vset.pattern.permute.xlu0 0
    %846 = vperm.xlu0 %845, %v776
    %v847 = vpop.permute.xlu0 %846
    %850 = vset.pattern.permute.xlu0 0
    %851 = vperm.xlu0 %850, %v777
    %v852 = vpop.permute.xlu0 %851
    %855 = vset.pattern.permute.xlu0 0
    %856 = vperm.xlu0 %855, %v778
    %v857 = vpop.permute.xlu0 %856
    %860 = vset.pattern.permute.xlu0 0
    %861 = vperm.xlu0 %860, %v779
    %v862 = vpop.permute.xlu0 %861
    %865 = vset.pattern.permute.xlu0 0
    %866 = vperm.xlu0 %865, %v780
    %v867 = vpop.permute.xlu0 %866
    %870 = vset.pattern.permute.xlu0 0
    %871 = vperm.xlu0 %870, %v781
    %v872 = vpop.permute.xlu0 %871
    %875 = vset.pattern.permute.xlu0 0
    %876 = vperm.xlu0 %875, %v782
    %v877 = vpop.permute.xlu0 %876
    %880 = vset.pattern.permute.xlu0 0
    %881 = vperm.xlu0 %880, %v783
    %v882 = vpop.permute.xlu0 %881
    %885 = vset.pattern.permute.xlu0 0
    %886 = vperm.xlu0 %885, %v784
    %v887 = vpop.permute.xlu0 %886
    %890 = vset.pattern.permute.xlu0 0
    %891 = vperm.xlu0 %890, %v785
    %v892 = vpop.permute.xlu0 %891
    %895 = vset.pattern.permute.xlu0 0
    %896 = vperm.xlu0 %895, %v786
    %v897 = vpop.permute.xlu0 %896
    %900 = vset.pattern.permute.xlu0 0
    %901 = vperm.xlu0 %900, %v787
    %v902 = vpop.permute.xlu0 %901
    %905 = vset.pattern.permute.xlu0 0
    %906 = vperm.xlu0 %905, %v788
    %v907 = vpop.permute.xlu0 %906
    %910 = vset.pattern.permute.xlu0 0
    %911 = vperm.xlu0 %910, %v789
    %v912 = vpop.permute.xlu0 %911
    %915 = vset.pattern.permute.xlu0 0
    %916 = vperm.xlu0 %915, %v790
    %v917 = vpop.permute.xlu0 %916
    %920 = vset.pattern.permute.xlu0 0
    %921 = vperm.xlu0 %920, %v791
    %v922 = vpop.permute.xlu0 %921
    %925 = vset.pattern.permute.xlu0 0
    %926 = vperm.xlu0 %925, %v792
    %v927 = vpop.permute.xlu0 %926
    %930 = vset.pattern.permute.xlu0 0
    %931 = vperm.xlu0 %930, %v793
    %v932 = vpop.permute.xlu0 %931
    %935 = vset.pattern.permute.xlu0 0
    %936 = vperm.xlu0 %935, %v794
    %v937 = vpop.permute.xlu0 %936
    %940 = vset.pattern.permute.xlu0 0
    %941 = vperm.xlu0 %940, %v795
    %v942 = vpop.permute.xlu0 %941
    %945 = vset.pattern.permute.xlu0 0
    %946 = vperm.xlu0 %945, %v796
    %v947 = vpop.permute.xlu0 %946
    %950 = vset.pattern.permute.xlu0 0
    %951 = vperm.xlu0 %950, %v797
    %v952 = vpop.permute.xlu0 %951
    %955 = vset.pattern.permute.xlu0 0
    %956 = vperm.xlu0 %955, %v798
    %v957 = vpop.permute.xlu0 %956
    %v991 = vunpack.c.l.b16 %v735
    %v992 = vunpack.c.h.b16 %v735
    %v993 = vunpack.c.l.b16 %v736
    %v994 = vunpack.c.h.b16 %v736
    %v995 = vunpack.c.l.b16 %v737
    %v996 = vunpack.c.h.b16 %v737
    %v997 = vunpack.c.l.b16 %v738
    %v998 = vunpack.c.h.b16 %v738
    %v999 = vunpack.c.l.b16 %v739
    %v1000 = vunpack.c.h.b16 %v739
    %v1001 = vunpack.c.l.b16 %v740
    %v1002 = vunpack.c.h.b16 %v740
    %v1003 = vunpack.c.l.b16 %v741
    %v1004 = vunpack.c.h.b16 %v741
    %v1005 = vunpack.c.l.b16 %v742
    %v1006 = vunpack.c.h.b16 %v742
    %v1007 = vunpack.c.l.b16 %v743
    %v1008 = vunpack.c.h.b16 %v743
    %v1009 = vunpack.c.l.b16 %v744
    %v1010 = vunpack.c.h.b16 %v744
    %v1011 = vunpack.c.l.b16 %v745
    %v1012 = vunpack.c.h.b16 %v745
    %v1013 = vunpack.c.l.b16 %v746
    %v1014 = vunpack.c.h.b16 %v746
    %v1015 = vunpack.c.l.b16 %v747
    %v1016 = vunpack.c.h.b16 %v747
    %v1017 = vunpack.c.l.b16 %v748
    %v1018 = vunpack.c.h.b16 %v748
    %v1019 = vunpack.c.l.b16 %v749
    %v1020 = vunpack.c.h.b16 %v749
    %v1021 = vunpack.c.l.b16 %v750
    %v1022 = vunpack.c.h.b16 %v750
    %v1023 = vunpack.c.l.b16 %v751
    %v1024 = vunpack.c.h.b16 %v751
    %v1025 = vunpack.c.l.b16 %v752
    %v1026 = vunpack.c.h.b16 %v752
    %v1027 = vunpack.c.l.b16 %v753
    %v1028 = vunpack.c.h.b16 %v753
    %v1029 = vunpack.c.l.b16 %v754
    %v1030 = vunpack.c.h.b16 %v754
    %v1031 = vunpack.c.l.b16 %v755
    %v1032 = vunpack.c.h.b16 %v755
    %v1033 = vunpack.c.l.b16 %v756
    %v1034 = vunpack.c.h.b16 %v756
    %v1035 = vunpack.c.l.b16 %v757
    %v1036 = vunpack.c.h.b16 %v757
    %v1037 = vunpack.c.l.b16 %v758
    %v1038 = vunpack.c.h.b16 %v758
    %v1039 = vunpack.c.l.b16 %v759
    %v1040 = vunpack.c.h.b16 %v759
    %v1041 = vunpack.c.l.b16 %v760
    %v1042 = vunpack.c.h.b16 %v760
    %v1043 = vunpack.c.l.b16 %v761
    %v1044 = vunpack.c.h.b16 %v761
    %v1045 = vunpack.c.l.b16 %v762
    %v1046 = vunpack.c.h.b16 %v762
    %v1047 = vunpack.c.l.b16 %v763
    %v1048 = vunpack.c.h.b16 %v763
    %v1049 = vunpack.c.l.b16 %v764
    %v1050 = vunpack.c.h.b16 %v764
    %v1051 = vunpack.c.l.b16 %v765
    %v1052 = vunpack.c.h.b16 %v765
    %v1053 = vunpack.c.l.b16 %v766
    %v1054 = vunpack.c.h.b16 %v766
    %v1055 = vpack.c.b16 %v993, %v991
    %v1056 = vpack.c.b16 %v994, %v992
    %v1057 = vpack.c.b16 %v997, %v995
    %v1058 = vpack.c.b16 %v998, %v996
    %v1059 = vpack.c.b16 %v1001, %v999
    %v1060 = vpack.c.b16 %v1002, %v1000
    %v1061 = vpack.c.b16 %v1005, %v1003
    %v1062 = vpack.c.b16 %v1006, %v1004
    %v1063 = vpack.c.b16 %v1009, %v1007
    %v1064 = vpack.c.b16 %v1010, %v1008
    %v1065 = vpack.c.b16 %v1013, %v1011
    %v1066 = vpack.c.b16 %v1014, %v1012
    %v1067 = vpack.c.b16 %v1017, %v1015
    %v1068 = vpack.c.b16 %v1018, %v1016
    %v1069 = vpack.c.b16 %v1021, %v1019
    %v1070 = vpack.c.b16 %v1022, %v1020
    %v1071 = vpack.c.b16 %v1025, %v1023
    %v1072 = vpack.c.b16 %v1026, %v1024
    %v1073 = vpack.c.b16 %v1029, %v1027
    %v1074 = vpack.c.b16 %v1030, %v1028
    %v1075 = vpack.c.b16 %v1033, %v1031
    %v1076 = vpack.c.b16 %v1034, %v1032
    %v1077 = vpack.c.b16 %v1037, %v1035
    %v1078 = vpack.c.b16 %v1038, %v1036
    %v1079 = vpack.c.b16 %v1041, %v1039
    %v1080 = vpack.c.b16 %v1042, %v1040
    %v1081 = vpack.c.b16 %v1045, %v1043
    %v1082 = vpack.c.b16 %v1046, %v1044
    %v1083 = vpack.c.b16 %v1049, %v1047
    %v1084 = vpack.c.b16 %v1050, %v1048
    %v1085 = vpack.c.b16 %v1053, %v1051
    %v1086 = vpack.c.b16 %v1054, %v1052
    %1119 = vmatprep.subr.bf16.mxu0 0
    %1120 = vmatpush1.bf16.msra.mxu0 %v719
    %1121 = vmatprep.subr.bf16.mxu0 0
    %1122 = vmatpush1.bf16.msra.mxu0 %v720
    %1123 = vmatprep.subr.bf16.mxu0 0
    %1124 = vmatpush1.bf16.msra.mxu0 %v721
    %1125 = vmatprep.subr.bf16.mxu0 0
    %1126 = vmatpush1.bf16.msra.mxu0 %v722
    %1127 = vmatprep.subr.bf16.mxu0 0
    %1128 = vmatpush1.bf16.msra.mxu0 %v723
    %1129 = vmatprep.subr.bf16.mxu0 0
    %1130 = vmatpush1.bf16.msra.mxu0 %v724
    %1131 = vmatprep.subr.bf16.mxu0 0
    %1132 = vmatpush1.bf16.msra.mxu0 %v725
    %1133 = vmatprep.subr.bf16.mxu0 0
    %1134 = vmatpush1.bf16.msra.mxu0 %v726
    %1135 = vmatprep.subr.bf16.mxu0 0
    %1136 = vmatpush1.bf16.msra.mxu0 %v727
    %1137 = vmatprep.subr.bf16.mxu0 0
    %1138 = vmatpush1.bf16.msra.mxu0 %v728
    %1139 = vmatprep.subr.bf16.mxu0 0
    %1140 = vmatpush1.bf16.msra.mxu0 %v729
    %1141 = vmatprep.subr.bf16.mxu0 0
    %1142 = vmatpush1.bf16.msra.mxu0 %v730
    %1143 = vmatprep.subr.bf16.mxu0 0
    %1144 = vmatpush1.bf16.msra.mxu0 %v731
    %1145 = vmatprep.subr.bf16.mxu0 0
    %1146 = vmatpush1.bf16.msra.mxu0 %v732
    %1147 = vmatprep.subr.bf16.mxu0 0
    %1148 = vmatpush1.bf16.msra.mxu0 %v733
    %1149 = vmatprep.subr.bf16.mxu0 0
    %1150 = vmatpush1.bf16.msra.mxu0 %v734
    %1151 = vmatprep.mubr.bf16.mxu0 %v1056
    %1152 = vmatmul.mubr.bf16.gmra.mrb[0].mxu0 %v1055
    %v1153 = vpop.f32.mrb[0].mxu0
    %v1154 = vadd.f32 %v802, %v1153
    %v1155 = vpop.f32.mrb[0].mxu0
    %v1156 = vpop.f32.mrb[0].mxu0
    %v1157 = vadd.f32 %v807, %v1156
    %v1158 = vpop.f32.mrb[0].mxu0
    %1159 = vmatprep.mubr.bf16.mxu0 %v1058
    %1160 = vmatmul.mubr.bf16.gmra.mrb[0].mxu0 %v1057
    %v1161 = vpop.f32.mrb[0].mxu0
    %v1162 = vadd.f32 %v812, %v1161
    %v1163 = vpop.f32.mrb[0].mxu0
    %v1164 = vpop.f32.mrb[0].mxu0
    %v1165 = vadd.f32 %v817, %v1164
    %v1166 = vpop.f32.mrb[0].mxu0
    %1167 = vmatprep.mubr.bf16.mxu0 %v1060
    %1168 = vmatmul.mubr.bf16.gmra.mrb[0].mxu0 %v1059
    %v1169 = vpop.f32.mrb[0].mxu0
    %v1170 = vadd.f32 %v822, %v1169
    %v1171 = vpop.f32.mrb[0].mxu0
    %v1172 = vpop.f32.mrb[0].mxu0
    %v1173 = vadd.f32 %v827, %v1172
    %v1174 = vpop.f32.mrb[0].mxu0
    %1175 = vmatprep.mubr.bf16.mxu0 %v1062
    %1176 = vmatmul.mubr.bf16.gmra.mrb[0].mxu0 %v1061
    %v1177 = vpop.f32.mrb[0].mxu0
    %v1178 = vadd.f32 %v832, %v1177
    %v1179 = vpop.f32.mrb[0].mxu0
    %v1180 = vpop.f32.mrb[0].mxu0
    %v1181 = vadd.f32 %v837, %v1180
    %v1182 = vpop.f32.mrb[0].mxu0
    %1183 = vmatprep.mubr.bf16.mxu0 %v1064
    %1184 = vmatmul.mubr.bf16.gmra.mrb[0].mxu0 %v1063
    %v1185 = vpop.f32.mrb[0].mxu0
    %v1186 = vadd.f32 %v842, %v1185
    %v1187 = vpop.f32.mrb[0].mxu0
    %v1188 = vpop.f32.mrb[0].mxu0
    %v1189 = vadd.f32 %v847, %v1188
    %v1190 = vpop.f32.mrb[0].mxu0
    %1191 = vmatprep.mubr.bf16.mxu0 %v1066
    %1192 = vmatmul.mubr.bf16.gmra.mrb[0].mxu0 %v1065
    %v1193 = vpop.f32.mrb[0].mxu0
    %v1194 = vadd.f32 %v852, %v1193
    %v1195 = vpop.f32.mrb[0].mxu0
    %v1196 = vpop.f32.mrb[0].mxu0
    %v1197 = vadd.f32 %v857, %v1196
    %v1198 = vpop.f32.mrb[0].mxu0
    %1199 = vmatprep.mubr.bf16.mxu0 %v1068
    %1200 = vmatmul.mubr.bf16.gmra.mrb[0].mxu0 %v1067
    %v1201 = vpop.f32.mrb[0].mxu0
    %v1202 = vadd.f32 %v862, %v1201
    %v1203 = vpop.f32.mrb[0].mxu0
    %v1204 = vpop.f32.mrb[0].mxu0
    %v1205 = vadd.f32 %v867, %v1204
    %v1206 = vpop.f32.mrb[0].mxu0
    %1207 = vmatprep.mubr.bf16.mxu0 %v1070
    %1208 = vmatmul.mubr.bf16.gmra.mrb[0].mxu0 %v1069
    %v1209 = vpop.f32.mrb[0].mxu0
    %v1210 = vadd.f32 %v872, %v1209
    %v1211 = vpop.f32.mrb[0].mxu0
    %v1212 = vpop.f32.mrb[0].mxu0
    %v1213 = vadd.f32 %v877, %v1212
    %v1214 = vpop.f32.mrb[0].mxu0
    %1215 = vmatprep.mubr.bf16.mxu0 %v1072
    %1216 = vmatmul.mubr.bf16.gmra.mrb[0].mxu0 %v1071
    %v1217 = vpop.f32.mrb[0].mxu0
    %v1218 = vadd.f32 %v882, %v1217
    %v1219 = vpop.f32.mrb[0].mxu0
    %v1220 = vpop.f32.mrb[0].mxu0
    %v1221 = vadd.f32 %v887, %v1220
    %v1222 = vpop.f32.mrb[0].mxu0
    %1223 = vmatprep.mubr.bf16.mxu0 %v1074
    %1224 = vmatmul.mubr.bf16.gmra.mrb[0].mxu0 %v1073
    %v1225 = vpop.f32.mrb[0].mxu0
    %v1226 = vadd.f32 %v892, %v1225
    %v1227 = vpop.f32.mrb[0].mxu0
    %v1228 = vpop.f32.mrb[0].mxu0
    %v1229 = vadd.f32 %v897, %v1228
    %v1230 = vpop.f32.mrb[0].mxu0
    %1231 = vmatprep.mubr.bf16.mxu0 %v1076
    %1232 = vmatmul.mubr.bf16.gmra.mrb[0].mxu0 %v1075
    %v1233 = vpop.f32.mrb[0].mxu0
    %v1234 = vadd.f32 %v902, %v1233
    %v1235 = vpop.f32.mrb[0].mxu0
    %v1236 = vpop.f32.mrb[0].mxu0
    %v1237 = vadd.f32 %v907, %v1236
    %v1238 = vpop.f32.mrb[0].mxu0
    %1239 = vmatprep.mubr.bf16.mxu0 %v1078
    %1240 = vmatmul.mubr.bf16.gmra.mrb[0].mxu0 %v1077
    %v1241 = vpop.f32.mrb[0].mxu0
    %v1242 = vadd.f32 %v912, %v1241
    %v1243 = vpop.f32.mrb[0].mxu0
    %v1244 = vpop.f32.mrb[0].mxu0
    %v1245 = vadd.f32 %v917, %v1244
    %v1246 = vpop.f32.mrb[0].mxu0
    %1247 = vmatprep.mubr.bf16.mxu0 %v1080
    %1248 = vmatmul.mubr.bf16.gmra.mrb[0].mxu0 %v1079
    %v1249 = vpop.f32.mrb[0].mxu0
    %v1250 = vadd.f32 %v922, %v1249
    %v1251 = vpop.f32.mrb[0].mxu0
    %v1252 = vpop.f32.mrb[0].mxu0
    %v1253 = vadd.f32 %v927, %v1252
    %v1254 = vpop.f32.mrb[0].mxu0
    %1255 = vmatprep.mubr.bf16.mxu0 %v1082
    %1256 = vmatmul.mubr.bf16.gmra.mrb[0].mxu0 %v1081
    %v1257 = vpop.f32.mrb[0].mxu0
    %v1258 = vadd.f32 %v932, %v1257
    %v1259 = vpop.f32.mrb[0].mxu0
    %v1260 = vpop.f32.mrb[0].mxu0
    %v1261 = vadd.f32 %v937, %v1260
    %v1262 = vpop.f32.mrb[0].mxu0
    %1263 = vmatprep.mubr.bf16.mxu0 %v1084
    %1264 = vmatmul.mubr.bf16.gmra.mrb[0].mxu0 %v1083
    %v1265 = vpop.f32.mrb[0].mxu0
    %v1266 = vadd.f32 %v942, %v1265
    %v1267 = vpop.f32.mrb[0].mxu0
    %v1268 = vpop.f32.mrb[0].mxu0
    %v1269 = vadd.f32 %v947, %v1268
    %v1270 = vpop.f32.mrb[0].mxu0
    %1271 = vmatprep.mubr.bf16.mxu0 %v1086
    %1272 = vmatmul.mubr.bf16.gmra.mrb[0].mxu0 %v1085
    %v1273 = vpop.f32.mrb[0].mxu0
    %v1274 = vadd.f32 %v952, %v1273
    %v1275 = vpop.f32.mrb[0].mxu0
    %v1276 = vpop.f32.mrb[0].mxu0
    %v1277 = vadd.f32 %v957, %v1276
    %v1278 = vpop.f32.mrb[0].mxu0
    %1279 = vdwg.mxu0
    %v1280 = vmax.f32 %v1154, 0.0
    %v1281 = vmax.f32 %v1157, 0.0
    %v1282 = vmax.f32 %v1162, 0.0
    %v1283 = vmax.f32 %v1165, 0.0
    %v1284 = vmax.f32 %v1170, 0.0
    %v1285 = vmax.f32 %v1173, 0.0
    %v1286 = vmax.f32 %v1178, 0.0
    %v1287 = vmax.f32 %v1181, 0.0
    %v1288 = vmax.f32 %v1186, 0.0
    %v1289 = vmax.f32 %v1189, 0.0
    %v1290 = vmax.f32 %v1194, 0.0
    %v1291 = vmax.f32 %v1197, 0.0
    %v1292 = vmax.f32 %v1202, 0.0
    %v1293 = vmax.f32 %v1205, 0.0
    %v1294 = vmax.f32 %v1210, 0.0
    %v1295 = vmax.f32 %v1213, 0.0
    %v1296 = vmax.f32 %v1218, 0.0
    %v1297 = vmax.f32 %v1221, 0.0
    %v1298 = vmax.f32 %v1226, 0.0
    %v1299 = vmax.f32 %v1229, 0.0
    %v1300 = vmax.f32 %v1234, 0.0
    %v1301 = vmax.f32 %v1237, 0.0
    %v1302 = vmax.f32 %v1242, 0.0
    %v1303 = vmax.f32 %v1245, 0.0
    %v1304 = vmax.f32 %v1250, 0.0
    %v1305 = vmax.f32 %v1253, 0.0
    %v1306 = vmax.f32 %v1258, 0.0
    %v1307 = vmax.f32 %v1261, 0.0
    %v1308 = vmax.f32 %v1266, 0.0
    %v1309 = vmax.f32 %v1269, 0.0
    %v1310 = vmax.f32 %v1274, 0.0
    %v1311 = vmax.f32 %v1277, 0.0
    %v1312 = vpack.c.bf16 %v1281, %v1280
    %v1313 = vpack.c.bf16 %v1283, %v1282
    %v1314 = vpack.c.bf16 %v1285, %v1284
    %v1315 = vpack.c.bf16 %v1287, %v1286
    %v1316 = vpack.c.bf16 %v1289, %v1288
    %v1317 = vpack.c.bf16 %v1291, %v1290
    %v1318 = vpack.c.bf16 %v1293, %v1292
    %v1319 = vpack.c.bf16 %v1295, %v1294
    %v1320 = vpack.c.bf16 %v1297, %v1296
    %v1321 = vpack.c.bf16 %v1299, %v1298
    %v1322 = vpack.c.bf16 %v1301, %v1300
    %v1323 = vpack.c.bf16 %v1303, %v1302
    %v1324 = vpack.c.bf16 %v1305, %v1304
    %v1325 = vpack.c.bf16 %v1307, %v1306
    %v1326 = vpack.c.bf16 %v1309, %v1308
    %v1327 = vpack.c.bf16 %v1311, %v1310
    %v1328 = vld [vmem:[%s5] sm:$0xff]
    %v1329 = vld [vmem:[%s5 + $0x8] sm:$0xff]
    %v1330 = vld [vmem:[%s5 + $0x10] sm:$0xff]
    %v1331 = vld [vmem:[%s5 + $0x18] sm:$0xff]
    %v1332 = vld [vmem:[%s5 + $0x20] sm:$0xff]
    %v1333 = vld [vmem:[%s5 + $0x28] sm:$0xff]
    %v1334 = vld [vmem:[%s5 + $0x30] sm:$0xff]
    %v1335 = vld [vmem:[%s5 + $0x38] sm:$0xff]
    %v1336 = vld [vmem:[%s6] sm:$0xff]
    %v1337 = vld [vmem:[%s6 + $0x8] sm:$0xff]
    %v1338 = vld [vmem:[%s6 + $0x10] sm:$0xff]
    %v1339 = vld [vmem:[%s6 + $0x18] sm:$0xff]
    %v1340 = vld [vmem:[%s6 + $0x20] sm:$0xff]
    %v1341 = vld [vmem:[%s6 + $0x28] sm:$0xff]
    %v1342 = vld [vmem:[%s6 + $0x30] sm:$0xff]
    %v1343 = vld [vmem:[%s6 + $0x38] sm:$0xff]
    %1345 = vset.pattern.permute.xlu0 0
    %1346 = vperm.xlu0 %1345, %v1336
    %v1347 = vpop.permute.xlu0 %1346
    %1350 = vset.pattern.permute.xlu0 0
    %1351 = vperm.xlu0 %1350, %v1337
    %v1352 = vpop.permute.xlu0 %1351
    %1355 = vset.pattern.permute.xlu0 0
    %1356 = vperm.xlu0 %1355, %v1338
    %v1357 = vpop.permute.xlu0 %1356
    %1360 = vset.pattern.permute.xlu0 0
    %1361 = vperm.xlu0 %1360, %v1339
    %v1362 = vpop.permute.xlu0 %1361
    %1365 = vset.pattern.permute.xlu0 0
    %1366 = vperm.xlu0 %1365, %v1340
    %v1367 = vpop.permute.xlu0 %1366
    %1370 = vset.pattern.permute.xlu0 0
    %1371 = vperm.xlu0 %1370, %v1341
    %v1372 = vpop.permute.xlu0 %1371
    %1375 = vset.pattern.permute.xlu0 0
    %1376 = vperm.xlu0 %1375, %v1342
    %v1377 = vpop.permute.xlu0 %1376
    %1380 = vset.pattern.permute.xlu0 0
    %1381 = vperm.xlu0 %1380, %v1343
    %v1382 = vpop.permute.xlu0 %1381
    %v1392 = vunpack.c.l.b16 %v1328
    %v1393 = vunpack.c.h.b16 %v1328
    %v1394 = vunpack.c.l.b16 %v1329
    %v1395 = vunpack.c.h.b16 %v1329
    %v1396 = vunpack.c.l.b16 %v1330
    %v1397 = vunpack.c.h.b16 %v1330
    %v1398 = vunpack.c.l.b16 %v1331
    %v1399 = vunpack.c.h.b16 %v1331
    %v1400 = vunpack.c.l.b16 %v1332
    %v1401 = vunpack.c.h.b16 %v1332
    %v1402 = vunpack.c.l.b16 %v1333
    %v1403 = vunpack.c.h.b16 %v1333
    %v1404 = vunpack.c.l.b16 %v1334
    %v1405 = vunpack.c.h.b16 %v1334
    %v1406 = vunpack.c.l.b16 %v1335
    %v1407 = vunpack.c.h.b16 %v1335
    %v1408 = vpack.c.b16 %v1394, %v1392
    %v1409 = vpack.c.b16 %v1395, %v1393
    %v1410 = vpack.c.b16 %v1398, %v1396
    %v1411 = vpack.c.b16 %v1399, %v1397
    %v1412 = vpack.c.b16 %v1402, %v1400
    %v1413 = vpack.c.b16 %v1403, %v1401
    %v1414 = vpack.c.b16 %v1406, %v1404
    %v1415 = vpack.c.b16 %v1407, %v1405
    %1424 = vmatprep.subr.bf16.mxu0 0
    %1425 = vmatpush1.bf16.msra.mxu0 %v1312
    %1426 = vmatprep.subr.bf16.mxu0 0
    %1427 = vmatpush1.bf16.msra.mxu0 %v1313
    %1428 = vmatprep.subr.bf16.mxu0 0
    %1429 = vmatpush1.bf16.msra.mxu0 %v1314
    %1430 = vmatprep.subr.bf16.mxu0 0
    %1431 = vmatpush1.bf16.msra.mxu0 %v1315
    %1432 = vmatprep.subr.bf16.mxu0 0
    %1433 = vmatpush1.bf16.msra.mxu0 %v1316
    %1434 = vmatprep.subr.bf16.mxu0 0
    %1435 = vmatpush1.bf16.msra.mxu0 %v1317
    %1436 = vmatprep.subr.bf16.mxu0 0
    %1437 = vmatpush1.bf16.msra.mxu0 %v1318
    %1438 = vmatprep.subr.bf16.mxu0 0
    %1439 = vmatpush1.bf16.msra.mxu0 %v1319
    %1440 = vmatprep.subr.bf16.mxu0 0
    %1441 = vmatpush1.bf16.msra.mxu0 %v1320
    %1442 = vmatprep.subr.bf16.mxu0 0
    %1443 = vmatpush1.bf16.msra.mxu0 %v1321
    %1444 = vmatprep.subr.bf16.mxu0 0
    %1445 = vmatpush1.bf16.msra.mxu0 %v1322
    %1446 = vmatprep.subr.bf16.mxu0 0
    %1447 = vmatpush1.bf16.msra.mxu0 %v1323
    %1448 = vmatprep.subr.bf16.mxu0 0
    %1449 = vmatpush1.bf16.msra.mxu0 %v1324
    %1450 = vmatprep.subr.bf16.mxu0 0
    %1451 = vmatpush1.bf16.msra.mxu0 %v1325
    %1452 = vmatprep.subr.bf16.mxu0 0
    %1453 = vmatpush1.bf16.msra.mxu0 %v1326
    %1454 = vmatprep.subr.bf16.mxu0 0
    %1455 = vmatpush1.bf16.msra.mxu0 %v1327
    %1456 = vmatprep.mubr.bf16.mxu0 %v1409
    %1457 = vmatmul.mubr.bf16.gmra.mrb[0].mxu0 %v1408
    %v1458 = vpop.f32.mrb[0].mxu0
    %v1459 = vadd.f32 %v1347, %v1458
    %v1460 = vpop.f32.mrb[0].mxu0
    %v1461 = vpop.f32.mrb[0].mxu0
    %v1462 = vadd.f32 %v1352, %v1461
    %v1463 = vpop.f32.mrb[0].mxu0
    %1464 = vmatprep.mubr.bf16.mxu0 %v1411
    %1465 = vmatmul.mubr.bf16.gmra.mrb[0].mxu0 %v1410
    %v1466 = vpop.f32.mrb[0].mxu0
    %v1467 = vadd.f32 %v1357, %v1466
    %v1468 = vpop.f32.mrb[0].mxu0
    %v1469 = vpop.f32.mrb[0].mxu0
    %v1470 = vadd.f32 %v1362, %v1469
    %v1471 = vpop.f32.mrb[0].mxu0
    %1472 = vmatprep.mubr.bf16.mxu0 %v1413
    %1473 = vmatmul.mubr.bf16.gmra.mrb[0].mxu0 %v1412
    %v1474 = vpop.f32.mrb[0].mxu0
    %v1475 = vadd.f32 %v1367, %v1474
    %v1476 = vpop.f32.mrb[0].mxu0
    %v1477 = vpop.f32.mrb[0].mxu0
    %v1478 = vadd.f32 %v1372, %v1477
    %v1479 = vpop.f32.mrb[0].mxu0
    %1480 = vmatprep.mubr.bf16.mxu0 %v1415
    %1481 = vmatmul.mubr.bf16.gmra.mrb[0].mxu0 %v1414
    %v1482 = vpop.f32.mrb[0].mxu0
    %v1483 = vadd.f32 %v1377, %v1482
    %v1484 = vpop.f32.mrb[0].mxu0
    %v1485 = vpop.f32.mrb[0].mxu0
    %v1486 = vadd.f32 %v1382, %v1485
    %v1487 = vpop.f32.mrb[0].mxu0
    %1488 = vdwg.mxu0
    %v1489 = vmax.f32 %v1459, 0.0
    %v1490 = vmax.f32 %v1462, 0.0
    %v1491 = vmax.f32 %v1467, 0.0
    %v1492 = vmax.f32 %v1470, 0.0
    %v1493 = vmax.f32 %v1475, 0.0
    %v1494 = vmax.f32 %v1478, 0.0
    %v1495 = vmax.f32 %v1483, 0.0
    %v1496 = vmax.f32 %v1486, 0.0
    %v1497 = vpack.c.bf16 %v1490, %v1489
    %v1498 = vpack.c.bf16 %v1492, %v1491
    %v1499 = vpack.c.bf16 %v1494, %v1493
    %v1500 = vpack.c.bf16 %v1496, %v1495
    %v1501 = vld [vmem:[%s7] sm:$0xf]
    %v1502 = vld [vmem:[%s7 + $0x4] sm:$0xf]
    %v1503 = vld [vmem:[%s7 + $0x8] sm:$0xf]
    %v1504 = vld [vmem:[%s7 + $0xc] sm:$0xf]
    %v1505 = vld [vmem:[%s7 + $0x10] sm:$0xf]
    %v1506 = vld [vmem:[%s7 + $0x14] sm:$0xf]
    %v1507 = vld [vmem:[%s7 + $0x18] sm:$0xf]
    %v1508 = vld [vmem:[%s7 + $0x1c] sm:$0xf]
    %v1509 = vld [vmem:[%s7 + $0x20] sm:$0xf]
    %v1510 = vld [vmem:[%s7 + $0x24] sm:$0xf]
    %v1511 = vld [vmem:[%s7 + $0x28] sm:$0xf]
    %v1512 = vld [vmem:[%s7 + $0x2c] sm:$0xf]
    %v1513 = vld [vmem:[%s7 + $0x30] sm:$0xf]
    %v1514 = vld [vmem:[%s7 + $0x34] sm:$0xf]
    %v1515 = vld [vmem:[%s7 + $0x38] sm:$0xf]
    %v1516 = vld [vmem:[%s7 + $0x3c] sm:$0xf]
    %v1517 = vld [vmem:[%s7 + $0x40] sm:$0xf]
    %v1518 = vld [vmem:[%s7 + $0x44] sm:$0xf]
    %v1519 = vld [vmem:[%s7 + $0x48] sm:$0xf]
    %v1520 = vld [vmem:[%s7 + $0x4c] sm:$0xf]
    %v1521 = vld [vmem:[%s7 + $0x50] sm:$0xf]
    %v1522 = vld [vmem:[%s7 + $0x54] sm:$0xf]
    %v1523 = vld [vmem:[%s7 + $0x58] sm:$0xf]
    %v1524 = vld [vmem:[%s7 + $0x5c] sm:$0xf]
    %v1525 = vld [vmem:[%s7 + $0x60] sm:$0xf]
    %v1526 = vld [vmem:[%s7 + $0x64] sm:$0xf]
    %v1527 = vld [vmem:[%s7 + $0x68] sm:$0xf]
    %v1528 = vld [vmem:[%s7 + $0x6c] sm:$0xf]
    %v1529 = vld [vmem:[%s7 + $0x70] sm:$0xf]
    %v1530 = vld [vmem:[%s7 + $0x74] sm:$0xf]
    %v1531 = vld [vmem:[%s7 + $0x78] sm:$0xf]
    %v1532 = vld [vmem:[%s7 + $0x7c] sm:$0xf]
    %v1533 = vld [vmem:[%s7 + $0x80] sm:$0xf]
    %v1534 = vld [vmem:[%s7 + $0x84] sm:$0xf]
    %v1535 = vld [vmem:[%s7 + $0x88] sm:$0xf]
    %v1536 = vld [vmem:[%s7 + $0x8c] sm:$0xf]
    %v1537 = vld [vmem:[%s7 + $0x90] sm:$0xf]
    %v1538 = vld [vmem:[%s7 + $0x94] sm:$0xf]
    %v1539 = vld [vmem:[%s7 + $0x98] sm:$0xf]
    %v1540 = vld [vmem:[%s7 + $0x9c] sm:$0xf]
    %v1541 = vld [vmem:[%s7 + $0xa0] sm:$0xf]
    %v1542 = vld [vmem:[%s7 + $0xa4] sm:$0xf]
    %v1543 = vld [vmem:[%s7 + $0xa8] sm:$0xf]
    %v1544 = vld [vmem:[%s7 + $0xac] sm:$0xf]
    %v1545 = vld [vmem:[%s7 + $0xb0] sm:$0xf]
    %v1546 = vld [vmem:[%s7 + $0xb4] sm:$0xf]
    %v1547 = vld [vmem:[%s7 + $0xb8] sm:$0xf]
    %v1548 = vld [vmem:[%s7 + $0xbc] sm:$0xf]
    %v1549 = vld [vmem:[%s7 + $0xc0] sm:$0xf]
    %v1550 = vld [vmem:[%s7 + $0xc4] sm:$0xf]
    %v1551 = vld [vmem:[%s7 + $0xc8] sm:$0xf]
    %v1552 = vld [vmem:[%s7 + $0xcc] sm:$0xf]
    %v1553 = vld [vmem:[%s7 + $0xd0] sm:$0xf]
    %v1554 = vld [vmem:[%s7 + $0xd4] sm:$0xf]
    %v1555 = vld [vmem:[%s7 + $0xd8] sm:$0xf]
    %v1556 = vld [vmem:[%s7 + $0xdc] sm:$0xf]
    %v1557 = vld [vmem:[%s8] sm:$0xff]
    %v1558 = vld [vmem:[%s8 + $0x8] sm:$0xff]
    %v1559 = vld [vmem:[%s8 + $0x10] sm:$0xff]
    %v1560 = vld [vmem:[%s8 + $0x18] sm:$0xff]
    %v1561 = vld [vmem:[%s8 + $0x20] sm:$0xff]
    %v1562 = vld [vmem:[%s8 + $0x28] sm:$0xff]
    %v1563 = vld [vmem:[%s8 + $0x30] sm:$0xff]
    %v1564 = vld [vmem:[%s8 + $0x38] sm:$0xff]
    %v1565 = vld [vmem:[%s8 + $0x40] sm:$0xff]
    %v1566 = vld [vmem:[%s8 + $0x48] sm:$0xff]
    %v1567 = vld [vmem:[%s8 + $0x50] sm:$0xff]
    %v1568 = vld [vmem:[%s8 + $0x58] sm:$0xff]
    %v1569 = vld [vmem:[%s8 + $0x60] sm:$0xff]
    %v1570 = vld [vmem:[%s8 + $0x68] sm:$0xff]
    %v1571 = vld [vmem:[%s8 + $0x70] sm:$0xff]
    %v1572 = vld [vmem:[%s8 + $0x78] sm:$0xff]
    %v1573 = vld [vmem:[%s8 + $0x80] sm:$0xff]
    %v1574 = vld [vmem:[%s8 + $0x88] sm:$0xff]
    %v1575 = vld [vmem:[%s8 + $0x90] sm:$0xff]
    %v1576 = vld [vmem:[%s8 + $0x98] sm:$0xff]
    %v1577 = vld [vmem:[%s8 + $0xa0] sm:$0xff]
    %v1578 = vld [vmem:[%s8 + $0xa8] sm:$0xff]
    %v1579 = vld [vmem:[%s8 + $0xb0] sm:$0xff]
    %v1580 = vld [vmem:[%s8 + $0xb8] sm:$0xff]
    %v1581 = vld [vmem:[%s8 + $0xc0] sm:$0xff]
    %v1582 = vld [vmem:[%s8 + $0xc8] sm:$0xff]
    %v1583 = vld [vmem:[%s8 + $0xd0] sm:$0xff]
    %v1584 = vld [vmem:[%s8 + $0xd8] sm:$0xff]
    %v1585 = vld [vmem:[%s8 + $0xe0] sm:$0xff]
    %v1586 = vld [vmem:[%s8 + $0xe8] sm:$0xff]
    %v1587 = vld [vmem:[%s8 + $0xf0] sm:$0xff]
    %v1588 = vld [vmem:[%s8 + $0xf8] sm:$0xff]
    %v1589 = vld [vmem:[%s8 + $0x100] sm:$0xff]
    %v1590 = vld [vmem:[%s8 + $0x108] sm:$0xff]
    %v1591 = vld [vmem:[%s8 + $0x110] sm:$0xff]
    %v1592 = vld [vmem:[%s8 + $0x118] sm:$0xff]
    %v1593 = vld [vmem:[%s8 + $0x120] sm:$0xff]
    %v1594 = vld [vmem:[%s8 + $0x128] sm:$0xff]
    %v1595 = vld [vmem:[%s8 + $0x130] sm:$0xff]
    %v1596 = vld [vmem:[%s8 + $0x138] sm:$0xff]
    %v1597 = vld [vmem:[%s8 + $0x140] sm:$0xff]
    %v1598 = vld [vmem:[%s8 + $0x148] sm:$0xff]
    %v1599 = vld [vmem:[%s8 + $0x150] sm:$0xff]
    %v1600 = vld [vmem:[%s8 + $0x158] sm:$0xff]
    %v1601 = vld [vmem:[%s8 + $0x160] sm:$0xff]
    %v1602 = vld [vmem:[%s8 + $0x168] sm:$0xff]
    %v1603 = vld [vmem:[%s8 + $0x170] sm:$0xff]
    %v1604 = vld [vmem:[%s8 + $0x178] sm:$0xff]
    %v1605 = vld [vmem:[%s8 + $0x180] sm:$0xff]
    %v1606 = vld [vmem:[%s8 + $0x188] sm:$0xff]
    %v1607 = vld [vmem:[%s8 + $0x190] sm:$0xff]
    %v1608 = vld [vmem:[%s8 + $0x198] sm:$0xff]
    %v1609 = vld [vmem:[%s8 + $0x1a0] sm:$0xff]
    %v1610 = vld [vmem:[%s8 + $0x1a8] sm:$0xff]
    %v1611 = vld [vmem:[%s8 + $0x1b0] sm:$0xff]
    %v1612 = vld [vmem:[%s8 + $0x1b8] sm:$0xff]
    %1614 = vset.pattern.permute.xlu0 0
    %1615 = vperm.xlu0 %1614, %v1557
    %v1616 = vpop.permute.xlu0 %1615
    %1619 = vset.pattern.permute.xlu0 0
    %1620 = vperm.xlu0 %1619, %v1558
    %v1621 = vpop.permute.xlu0 %1620
    %1624 = vset.pattern.permute.xlu0 0
    %1625 = vperm.xlu0 %1624, %v1559
    %v1626 = vpop.permute.xlu0 %1625
    %1629 = vset.pattern.permute.xlu0 0
    %1630 = vperm.xlu0 %1629, %v1560
    %v1631 = vpop.permute.xlu0 %1630
    %1634 = vset.pattern.permute.xlu0 0
    %1635 = vperm.xlu0 %1634, %v1561
    %v1636 = vpop.permute.xlu0 %1635
    %1639 = vset.pattern.permute.xlu0 0
    %1640 = vperm.xlu0 %1639, %v1562
    %v1641 = vpop.permute.xlu0 %1640
    %1644 = vset.pattern.permute.xlu0 0
    %1645 = vperm.xlu0 %1644, %v1563
    %v1646 = vpop.permute.xlu0 %1645
    %1649 = vset.pattern.permute.xlu0 0
    %1650 = vperm.xlu0 %1649, %v1564
    %v1651 = vpop.permute.xlu0 %1650
    %1654 = vset.pattern.permute.xlu0 0
    %1655 = vperm.xlu0 %1654, %v1565
    %v1656 = vpop.permute.xlu0 %1655
    %1659 = vset.pattern.permute.xlu0 0
    %1660 = vperm.xlu0 %1659, %v1566
    %v1661 = vpop.permute.xlu0 %1660
    %1664 = vset.pattern.permute.xlu0 0
    %1665 = vperm.xlu0 %1664, %v1567
    %v1666 = vpop.permute.xlu0 %1665
    %1669 = vset.pattern.permute.xlu0 0
    %1670 = vperm.xlu0 %1669, %v1568
    %v1671 = vpop.permute.xlu0 %1670
    %1674 = vset.pattern.permute.xlu0 0
    %1675 = vperm.xlu0 %1674, %v1569
    %v1676 = vpop.permute.xlu0 %1675
    %1679 = vset.pattern.permute.xlu0 0
    %1680 = vperm.xlu0 %1679, %v1570
    %v1681 = vpop.permute.xlu0 %1680
    %1684 = vset.pattern.permute.xlu0 0
    %1685 = vperm.xlu0 %1684, %v1571
    %v1686 = vpop.permute.xlu0 %1685
    %1689 = vset.pattern.permute.xlu0 0
    %1690 = vperm.xlu0 %1689, %v1572
    %v1691 = vpop.permute.xlu0 %1690
    %1694 = vset.pattern.permute.xlu0 0
    %1695 = vperm.xlu0 %1694, %v1573
    %v1696 = vpop.permute.xlu0 %1695
    %1699 = vset.pattern.permute.xlu0 0
    %1700 = vperm.xlu0 %1699, %v1574
    %v1701 = vpop.permute.xlu0 %1700
    %1704 = vset.pattern.permute.xlu0 0
    %1705 = vperm.xlu0 %1704, %v1575
    %v1706 = vpop.permute.xlu0 %1705
    %1709 = vset.pattern.permute.xlu0 0
    %1710 = vperm.xlu0 %1709, %v1576
    %v1711 = vpop.permute.xlu0 %1710
    %1714 = vset.pattern.permute.xlu0 0
    %1715 = vperm.xlu0 %1714, %v1577
    %v1716 = vpop.permute.xlu0 %1715
    %1719 = vset.pattern.permute.xlu0 0
    %1720 = vperm.xlu0 %1719, %v1578
    %v1721 = vpop.permute.xlu0 %1720
    %1724 = vset.pattern.permute.xlu0 0
    %1725 = vperm.xlu0 %1724, %v1579
    %v1726 = vpop.permute.xlu0 %1725
    %1729 = vset.pattern.permute.xlu0 0
    %1730 = vperm.xlu0 %1729, %v1580
    %v1731 = vpop.permute.xlu0 %1730
    %1734 = vset.pattern.permute.xlu0 0
    %1735 = vperm.xlu0 %1734, %v1581
    %v1736 = vpop.permute.xlu0 %1735
    %1739 = vset.pattern.permute.xlu0 0
    %1740 = vperm.xlu0 %1739, %v1582
    %v1741 = vpop.permute.xlu0 %1740
    %1744 = vset.pattern.permute.xlu0 0
    %1745 = vperm.xlu0 %1744, %v1583
    %v1746 = vpop.permute.xlu0 %1745
    %1749 = vset.pattern.permute.xlu0 0
    %1750 = vperm.xlu0 %1749, %v1584
    %v1751 = vpop.permute.xlu0 %1750
    %1754 = vset.pattern.permute.xlu0 0
    %1755 = vperm.xlu0 %1754, %v1585
    %v1756 = vpop.permute.xlu0 %1755
    %1759 = vset.pattern.permute.xlu0 0
    %1760 = vperm.xlu0 %1759, %v1586
    %v1761 = vpop.permute.xlu0 %1760
    %1764 = vset.pattern.permute.xlu0 0
    %1765 = vperm.xlu0 %1764, %v1587
    %v1766 = vpop.permute.xlu0 %1765
    %1769 = vset.pattern.permute.xlu0 0
    %1770 = vperm.xlu0 %1769, %v1588
    %v1771 = vpop.permute.xlu0 %1770
    %1774 = vset.pattern.permute.xlu0 0
    %1775 = vperm.xlu0 %1774, %v1589
    %v1776 = vpop.permute.xlu0 %1775
    %1779 = vset.pattern.permute.xlu0 0
    %1780 = vperm.xlu0 %1779, %v1590
    %v1781 = vpop.permute.xlu0 %1780
    %1784 = vset.pattern.permute.xlu0 0
    %1785 = vperm.xlu0 %1784, %v1591
    %v1786 = vpop.permute.xlu0 %1785
    %1789 = vset.pattern.permute.xlu0 0
    %1790 = vperm.xlu0 %1789, %v1592
    %v1791 = vpop.permute.xlu0 %1790
    %1794 = vset.pattern.permute.xlu0 0
    %1795 = vperm.xlu0 %1794, %v1593
    %v1796 = vpop.permute.xlu0 %1795
    %1799 = vset.pattern.permute.xlu0 0
    %1800 = vperm.xlu0 %1799, %v1594
    %v1801 = vpop.permute.xlu0 %1800
    %1804 = vset.pattern.permute.xlu0 0
    %1805 = vperm.xlu0 %1804, %v1595
    %v1806 = vpop.permute.xlu0 %1805
    %1809 = vset.pattern.permute.xlu0 0
    %1810 = vperm.xlu0 %1809, %v1596
    %v1811 = vpop.permute.xlu0 %1810
    %1814 = vset.pattern.permute.xlu0 0
    %1815 = vperm.xlu0 %1814, %v1597
    %v1816 = vpop.permute.xlu0 %1815
    %1819 = vset.pattern.permute.xlu0 0
    %1820 = vperm.xlu0 %1819, %v1598
    %v1821 = vpop.permute.xlu0 %1820
    %1824 = vset.pattern.permute.xlu0 0
    %1825 = vperm.xlu0 %1824, %v1599
    %v1826 = vpop.permute.xlu0 %1825
    %1829 = vset.pattern.permute.xlu0 0
    %1830 = vperm.xlu0 %1829, %v1600
    %v1831 = vpop.permute.xlu0 %1830
    %1834 = vset.pattern.permute.xlu0 0
    %1835 = vperm.xlu0 %1834, %v1601
    %v1836 = vpop.permute.xlu0 %1835
    %1839 = vset.pattern.permute.xlu0 0
    %1840 = vperm.xlu0 %1839, %v1602
    %v1841 = vpop.permute.xlu0 %1840
    %1844 = vset.pattern.permute.xlu0 0
    %1845 = vperm.xlu0 %1844, %v1603
    %v1846 = vpop.permute.xlu0 %1845
    %1849 = vset.pattern.permute.xlu0 0
    %1850 = vperm.xlu0 %1849, %v1604
    %v1851 = vpop.permute.xlu0 %1850
    %1854 = vset.pattern.permute.xlu0 0
    %1855 = vperm.xlu0 %1854, %v1605
    %v1856 = vpop.permute.xlu0 %1855
    %1859 = vset.pattern.permute.xlu0 0
    %1860 = vperm.xlu0 %1859, %v1606
    %v1861 = vpop.permute.xlu0 %1860
    %1864 = vset.pattern.permute.xlu0 0
    %1865 = vperm.xlu0 %1864, %v1607
    %v1866 = vpop.permute.xlu0 %1865
    %1869 = vset.pattern.permute.xlu0 0
    %1870 = vperm.xlu0 %1869, %v1608
    %v1871 = vpop.permute.xlu0 %1870
    %1874 = vset.pattern.permute.xlu0 0
    %1875 = vperm.xlu0 %1874, %v1609
    %v1876 = vpop.permute.xlu0 %1875
    %1879 = vset.pattern.permute.xlu0 0
    %1880 = vperm.xlu0 %1879, %v1610
    %v1881 = vpop.permute.xlu0 %1880
    %1884 = vset.pattern.permute.xlu0 0
    %1885 = vperm.xlu0 %1884, %v1611
    %v1886 = vpop.permute.xlu0 %1885
    %1889 = vset.pattern.permute.xlu0 0
    %1890 = vperm.xlu0 %1889, %v1612
    %v1891 = vpop.permute.xlu0 %1890
    %v1949 = vunpack.c.l.b16 %v1501
    %v1950 = vunpack.c.l.b16 %v1502
    %v1951 = vunpack.c.l.b16 %v1503
    %v1952 = vunpack.c.l.b16 %v1504
    %v1953 = vunpack.c.l.b16 %v1505
    %v1954 = vunpack.c.l.b16 %v1506
    %v1955 = vunpack.c.l.b16 %v1507
    %v1956 = vunpack.c.l.b16 %v1508
    %v1957 = vunpack.c.l.b16 %v1509
    %v1958 = vunpack.c.l.b16 %v1510
    %v1959 = vunpack.c.l.b16 %v1511
    %v1960 = vunpack.c.l.b16 %v1512
    %v1961 = vunpack.c.l.b16 %v1513
    %v1962 = vunpack.c.l.b16 %v1514
    %v1963 = vunpack.c.l.b16 %v1515
    %v1964 = vunpack.c.l.b16 %v1516
    %v1965 = vunpack.c.l.b16 %v1517
    %v1966 = vunpack.c.l.b16 %v1518
    %v1967 = vunpack.c.l.b16 %v1519
    %v1968 = vunpack.c.l.b16 %v1520
    %v1969 = vunpack.c.l.b16 %v1521
    %v1970 = vunpack.c.l.b16 %v1522
    %v1971 = vunpack.c.l.b16 %v1523
    %v1972 = vunpack.c.l.b16 %v1524
    %v1973 = vunpack.c.l.b16 %v1525
    %v1974 = vunpack.c.l.b16 %v1526
    %v1975 = vunpack.c.l.b16 %v1527
    %v1976 = vunpack.c.l.b16 %v1528
    %v1977 = vunpack.c.l.b16 %v1529
    %v1978 = vunpack.c.l.b16 %v1530
    %v1979 = vunpack.c.l.b16 %v1531
    %v1980 = vunpack.c.l.b16 %v1532
    %v1981 = vunpack.c.l.b16 %v1533
    %v1982 = vunpack.c.l.b16 %v1534
    %v1983 = vunpack.c.l.b16 %v1535
    %v1984 = vunpack.c.l.b16 %v1536
    %v1985 = vunpack.c.l.b16 %v1537
    %v1986 = vunpack.c.l.b16 %v1538
    %v1987 = vunpack.c.l.b16 %v1539
    %v1988 = vunpack.c.l.b16 %v1540
    %v1989 = vunpack.c.l.b16 %v1541
    %v1990 = vunpack.c.l.b16 %v1542
    %v1991 = vunpack.c.l.b16 %v1543
    %v1992 = vunpack.c.l.b16 %v1544
    %v1993 = vunpack.c.l.b16 %v1545
    %v1994 = vunpack.c.l.b16 %v1546
    %v1995 = vunpack.c.l.b16 %v1547
    %v1996 = vunpack.c.l.b16 %v1548
    %v1997 = vunpack.c.l.b16 %v1549
    %v1998 = vunpack.c.l.b16 %v1550
    %v1999 = vunpack.c.l.b16 %v1551
    %v2000 = vunpack.c.l.b16 %v1552
    %v2001 = vunpack.c.l.b16 %v1553
    %v2002 = vunpack.c.l.b16 %v1554
    %v2003 = vunpack.c.l.b16 %v1555
    %v2004 = vunpack.c.l.b16 %v1556
    %v2005 = vpack.c.b16 %v1950, %v1949
    %v2006 = vpack.c.b16 %v1952, %v1951
    %v2007 = vpack.c.b16 %v1954, %v1953
    %v2008 = vpack.c.b16 %v1956, %v1955
    %v2009 = vpack.c.b16 %v1958, %v1957
    %v2010 = vpack.c.b16 %v1960, %v1959
    %v2011 = vpack.c.b16 %v1962, %v1961
    %v2012 = vpack.c.b16 %v1964, %v1963
    %v2013 = vpack.c.b16 %v1966, %v1965
    %v2014 = vpack.c.b16 %v1968, %v1967
    %v2015 = vpack.c.b16 %v1970, %v1969
    %v2016 = vpack.c.b16 %v1972, %v1971
    %v2017 = vpack.c.b16 %v1974, %v1973
    %v2018 = vpack.c.b16 %v1976, %v1975
    %v2019 = vpack.c.b16 %v1978, %v1977
    %v2020 = vpack.c.b16 %v1980, %v1979
    %v2021 = vpack.c.b16 %v1982, %v1981
    %v2022 = vpack.c.b16 %v1984, %v1983
    %v2023 = vpack.c.b16 %v1986, %v1985
    %v2024 = vpack.c.b16 %v1988, %v1987
    %v2025 = vpack.c.b16 %v1990, %v1989
    %v2026 = vpack.c.b16 %v1992, %v1991
    %v2027 = vpack.c.b16 %v1994, %v1993
    %v2028 = vpack.c.b16 %v1996, %v1995
    %v2029 = vpack.c.b16 %v1998, %v1997
    %v2030 = vpack.c.b16 %v2000, %v1999
    %v2031 = vpack.c.b16 %v2002, %v2001
    %v2032 = vpack.c.b16 %v2004, %v2003
    %vm2033 = vcmask 523264
    %v2035 = vsel %vm2033, %v2005, 0
    %v2038 = vsel %vm2033, %v2006, 0
    %v2041 = vsel %vm2033, %v2007, 0
    %v2044 = vsel %vm2033, %v2008, 0
    %v2047 = vsel %vm2033, %v2009, 0
    %v2050 = vsel %vm2033, %v2010, 0
    %v2053 = vsel %vm2033, %v2011, 0
    %v2056 = vsel %vm2033, %v2012, 0
    %v2059 = vsel %vm2033, %v2013, 0
    %v2062 = vsel %vm2033, %v2014, 0
    %v2065 = vsel %vm2033, %v2015, 0
    %v2068 = vsel %vm2033, %v2016, 0
    %v2071 = vsel %vm2033, %v2017, 0
    %v2074 = vsel %vm2033, %v2018, 0
    %v2077 = vsel %vm2033, %v2019, 0
    %v2080 = vsel %vm2033, %v2020, 0
    %v2083 = vsel %vm2033, %v2021, 0
    %v2086 = vsel %vm2033, %v2022, 0
    %v2089 = vsel %vm2033, %v2023, 0
    %v2092 = vsel %vm2033, %v2024, 0
    %v2095 = vsel %vm2033, %v2025, 0
    %v2098 = vsel %vm2033, %v2026, 0
    %v2101 = vsel %vm2033, %v2027, 0
    %v2104 = vsel %vm2033, %v2028, 0
    %v2107 = vsel %vm2033, %v2029, 0
    %v2110 = vsel %vm2033, %v2030, 0
    %v2113 = vsel %vm2033, %v2031, 0
    %v2116 = vsel %vm2033, %v2032, 0
    %2118 = vmatprep.subr.bf16.mxu0 0
    %2119 = vmatpush1.bf16.msra.mxu0 %v1497
    %2120 = vmatprep.subr.bf16.mxu0 0
    %2121 = vmatpush1.bf16.msra.mxu0 %v1498
    %2122 = vmatprep.subr.bf16.mxu0 0
    %2123 = vmatpush1.bf16.msra.mxu0 %v1499
    %2124 = vmatprep.subr.bf16.mxu0 0
    %2125 = vmatpush1.bf16.msra.mxu0 %v1500
    %2126 = vmatprep.subr.bf16.mxu0 0
    %2127 = vmatpush1.bf16.msra.mxu0 0
    %2128 = vmatprep.subr.bf16.mxu0 0
    %2129 = vmatpush1.bf16.msra.mxu0 0
    %2130 = vmatprep.subr.bf16.mxu0 0
    %2131 = vmatpush1.bf16.msra.mxu0 0
    %2132 = vmatprep.subr.bf16.mxu0 0
    %2133 = vmatpush1.bf16.msra.mxu0 0
    %2134 = vmatprep.subr.bf16.mxu0 0
    %2135 = vmatpush1.bf16.msra.mxu0 0
    %2136 = vmatprep.subr.bf16.mxu0 0
    %2137 = vmatpush1.bf16.msra.mxu0 0
    %2138 = vmatprep.subr.bf16.mxu0 0
    %2139 = vmatpush1.bf16.msra.mxu0 0
    %2140 = vmatprep.subr.bf16.mxu0 0
    %2141 = vmatpush1.bf16.msra.mxu0 0
    %2142 = vmatprep.subr.bf16.mxu0 0
    %2143 = vmatpush1.bf16.msra.mxu0 0
    %2144 = vmatprep.subr.bf16.mxu0 0
    %2145 = vmatpush1.bf16.msra.mxu0 0
    %2146 = vmatprep.subr.bf16.mxu0 0
    %2147 = vmatpush1.bf16.msra.mxu0 0
    %2148 = vmatprep.subr.bf16.mxu0 0
    %2149 = vmatpush1.bf16.msra.mxu0 0
    %2150 = vmatprep.mubr.bf16.mxu0 0
    %2151 = vmatmul.mubr.bf16.gmra.mrb[0].mxu0 %v2035
    %v2152 = vpop.f32.mrb[0].mxu0
    %v2153 = vadd.f32 %v1616, %v2152
    %v2154 = vpop.f32.mrb[0].mxu0
    %v2155 = vpop.f32.mrb[0].mxu0
    %v2156 = vadd.f32 %v1621, %v2155
    %v2157 = vpop.f32.mrb[0].mxu0
    %2158 = vmatprep.mubr.bf16.mxu0 0
    %2159 = vmatmul.mubr.bf16.gmra.mrb[0].mxu0 %v2038
    %v2160 = vpop.f32.mrb[0].mxu0
    %v2161 = vadd.f32 %v1626, %v2160
    %v2162 = vpop.f32.mrb[0].mxu0
    %v2163 = vpop.f32.mrb[0].mxu0
    %v2164 = vadd.f32 %v1631, %v2163
    %v2165 = vpop.f32.mrb[0].mxu0
    %2166 = vmatprep.mubr.bf16.mxu0 0
    %2167 = vmatmul.mubr.bf16.gmra.mrb[0].mxu0 %v2041
    %v2168 = vpop.f32.mrb[0].mxu0
    %v2169 = vadd.f32 %v1636, %v2168
    %v2170 = vpop.f32.mrb[0].mxu0
    %v2171 = vpop.f32.mrb[0].mxu0
    %v2172 = vadd.f32 %v1641, %v2171
    %v2173 = vpop.f32.mrb[0].mxu0
    %2174 = vmatprep.mubr.bf16.mxu0 0
    %2175 = vmatmul.mubr.bf16.gmra.mrb[0].mxu0 %v2044
    %v2176 = vpop.f32.mrb[0].mxu0
    %v2177 = vadd.f32 %v1646, %v2176
    %v2178 = vpop.f32.mrb[0].mxu0
    %v2179 = vpop.f32.mrb[0].mxu0
    %v2180 = vadd.f32 %v1651, %v2179
    %v2181 = vpop.f32.mrb[0].mxu0
    %2182 = vmatprep.mubr.bf16.mxu0 0
    %2183 = vmatmul.mubr.bf16.gmra.mrb[0].mxu0 %v2047
    %v2184 = vpop.f32.mrb[0].mxu0
    %v2185 = vadd.f32 %v1656, %v2184
    %v2186 = vpop.f32.mrb[0].mxu0
    %v2187 = vpop.f32.mrb[0].mxu0
    %v2188 = vadd.f32 %v1661, %v2187
    %v2189 = vpop.f32.mrb[0].mxu0
    %2190 = vmatprep.mubr.bf16.mxu0 0
    %2191 = vmatmul.mubr.bf16.gmra.mrb[0].mxu0 %v2050
    %v2192 = vpop.f32.mrb[0].mxu0
    %v2193 = vadd.f32 %v1666, %v2192
    %v2194 = vpop.f32.mrb[0].mxu0
    %v2195 = vpop.f32.mrb[0].mxu0
    %v2196 = vadd.f32 %v1671, %v2195
    %v2197 = vpop.f32.mrb[0].mxu0
    %2198 = vmatprep.mubr.bf16.mxu0 0
    %2199 = vmatmul.mubr.bf16.gmra.mrb[0].mxu0 %v2053
    %v2200 = vpop.f32.mrb[0].mxu0
    %v2201 = vadd.f32 %v1676, %v2200
    %v2202 = vpop.f32.mrb[0].mxu0
    %v2203 = vpop.f32.mrb[0].mxu0
    %v2204 = vadd.f32 %v1681, %v2203
    %v2205 = vpop.f32.mrb[0].mxu0
    %2206 = vmatprep.mubr.bf16.mxu0 0
    %2207 = vmatmul.mubr.bf16.gmra.mrb[0].mxu0 %v2056
    %v2208 = vpop.f32.mrb[0].mxu0
    %v2209 = vadd.f32 %v1686, %v2208
    %v2210 = vpop.f32.mrb[0].mxu0
    %v2211 = vpop.f32.mrb[0].mxu0
    %v2212 = vadd.f32 %v1691, %v2211
    %v2213 = vpop.f32.mrb[0].mxu0
    %2214 = vmatprep.mubr.bf16.mxu0 0
    %2215 = vmatmul.mubr.bf16.gmra.mrb[0].mxu0 %v2059
    %v2216 = vpop.f32.mrb[0].mxu0
    %v2217 = vadd.f32 %v1696, %v2216
    %v2218 = vpop.f32.mrb[0].mxu0
    %v2219 = vpop.f32.mrb[0].mxu0
    %v2220 = vadd.f32 %v1701, %v2219
    %v2221 = vpop.f32.mrb[0].mxu0
    %2222 = vmatprep.mubr.bf16.mxu0 0
    %2223 = vmatmul.mubr.bf16.gmra.mrb[0].mxu0 %v2062
    %v2224 = vpop.f32.mrb[0].mxu0
    %v2225 = vadd.f32 %v1706, %v2224
    %v2226 = vpop.f32.mrb[0].mxu0
    %v2227 = vpop.f32.mrb[0].mxu0
    %v2228 = vadd.f32 %v1711, %v2227
    %v2229 = vpop.f32.mrb[0].mxu0
    %2230 = vmatprep.mubr.bf16.mxu0 0
    %2231 = vmatmul.mubr.bf16.gmra.mrb[0].mxu0 %v2065
    %v2232 = vpop.f32.mrb[0].mxu0
    %v2233 = vadd.f32 %v1716, %v2232
    %v2234 = vpop.f32.mrb[0].mxu0
    %v2235 = vpop.f32.mrb[0].mxu0
    %v2236 = vadd.f32 %v1721, %v2235
    %v2237 = vpop.f32.mrb[0].mxu0
    %2238 = vmatprep.mubr.bf16.mxu0 0
    %2239 = vmatmul.mubr.bf16.gmra.mrb[0].mxu0 %v2068
    %v2240 = vpop.f32.mrb[0].mxu0
    %v2241 = vadd.f32 %v1726, %v2240
    %v2242 = vpop.f32.mrb[0].mxu0
    %v2243 = vpop.f32.mrb[0].mxu0
    %v2244 = vadd.f32 %v1731, %v2243
    %v2245 = vpop.f32.mrb[0].mxu0
    %2246 = vmatprep.mubr.bf16.mxu0 0
    %2247 = vmatmul.mubr.bf16.gmra.mrb[0].mxu0 %v2071
    %v2248 = vpop.f32.mrb[0].mxu0
    %v2249 = vadd.f32 %v1736, %v2248
    %v2250 = vpop.f32.mrb[0].mxu0
    %v2251 = vpop.f32.mrb[0].mxu0
    %v2252 = vadd.f32 %v1741, %v2251
    %v2253 = vpop.f32.mrb[0].mxu0
    %2254 = vmatprep.mubr.bf16.mxu0 0
    %2255 = vmatmul.mubr.bf16.gmra.mrb[0].mxu0 %v2074
    %v2256 = vpop.f32.mrb[0].mxu0
    %v2257 = vadd.f32 %v1746, %v2256
    %v2258 = vpop.f32.mrb[0].mxu0
    %v2259 = vpop.f32.mrb[0].mxu0
    %v2260 = vadd.f32 %v1751, %v2259
    %v2261 = vpop.f32.mrb[0].mxu0
    %2262 = vmatprep.mubr.bf16.mxu0 0
    %2263 = vmatmul.mubr.bf16.gmra.mrb[0].mxu0 %v2077
    %v2264 = vpop.f32.mrb[0].mxu0
    %v2265 = vadd.f32 %v1756, %v2264
    %v2266 = vpop.f32.mrb[0].mxu0
    %v2267 = vpop.f32.mrb[0].mxu0
    %v2268 = vadd.f32 %v1761, %v2267
    %v2269 = vpop.f32.mrb[0].mxu0
    %2270 = vmatprep.mubr.bf16.mxu0 0
    %2271 = vmatmul.mubr.bf16.gmra.mrb[0].mxu0 %v2080
    %v2272 = vpop.f32.mrb[0].mxu0
    %v2273 = vadd.f32 %v1766, %v2272
    %v2274 = vpop.f32.mrb[0].mxu0
    %v2275 = vpop.f32.mrb[0].mxu0
    %v2276 = vadd.f32 %v1771, %v2275
    %v2277 = vpop.f32.mrb[0].mxu0
    %2278 = vmatprep.mubr.bf16.mxu0 0
    %2279 = vmatmul.mubr.bf16.gmra.mrb[0].mxu0 %v2083
    %v2280 = vpop.f32.mrb[0].mxu0
    %v2281 = vadd.f32 %v1776, %v2280
    %v2282 = vpop.f32.mrb[0].mxu0
    %v2283 = vpop.f32.mrb[0].mxu0
    %v2284 = vadd.f32 %v1781, %v2283
    %v2285 = vpop.f32.mrb[0].mxu0
    %2286 = vmatprep.mubr.bf16.mxu0 0
    %2287 = vmatmul.mubr.bf16.gmra.mrb[0].mxu0 %v2086
    %v2288 = vpop.f32.mrb[0].mxu0
    %v2289 = vadd.f32 %v1786, %v2288
    %v2290 = vpop.f32.mrb[0].mxu0
    %v2291 = vpop.f32.mrb[0].mxu0
    %v2292 = vadd.f32 %v1791, %v2291
    %v2293 = vpop.f32.mrb[0].mxu0
    %2294 = vmatprep.mubr.bf16.mxu0 0
    %2295 = vmatmul.mubr.bf16.gmra.mrb[0].mxu0 %v2089
    %v2296 = vpop.f32.mrb[0].mxu0
    %v2297 = vadd.f32 %v1796, %v2296
    %v2298 = vpop.f32.mrb[0].mxu0
    %v2299 = vpop.f32.mrb[0].mxu0
    %v2300 = vadd.f32 %v1801, %v2299
    %v2301 = vpop.f32.mrb[0].mxu0
    %2302 = vmatprep.mubr.bf16.mxu0 0
    %2303 = vmatmul.mubr.bf16.gmra.mrb[0].mxu0 %v2092
    %v2304 = vpop.f32.mrb[0].mxu0
    %v2305 = vadd.f32 %v1806, %v2304
    %v2306 = vpop.f32.mrb[0].mxu0
    %v2307 = vpop.f32.mrb[0].mxu0
    %v2308 = vadd.f32 %v1811, %v2307
    %v2309 = vpop.f32.mrb[0].mxu0
    %2310 = vmatprep.mubr.bf16.mxu0 0
    %2311 = vmatmul.mubr.bf16.gmra.mrb[0].mxu0 %v2095
    %v2312 = vpop.f32.mrb[0].mxu0
    %v2313 = vadd.f32 %v1816, %v2312
    %v2314 = vpop.f32.mrb[0].mxu0
    %v2315 = vpop.f32.mrb[0].mxu0
    %v2316 = vadd.f32 %v1821, %v2315
    %v2317 = vpop.f32.mrb[0].mxu0
    %2318 = vmatprep.mubr.bf16.mxu0 0
    %2319 = vmatmul.mubr.bf16.gmra.mrb[0].mxu0 %v2098
    %v2320 = vpop.f32.mrb[0].mxu0
    %v2321 = vadd.f32 %v1826, %v2320
    %v2322 = vpop.f32.mrb[0].mxu0
    %v2323 = vpop.f32.mrb[0].mxu0
    %v2324 = vadd.f32 %v1831, %v2323
    %v2325 = vpop.f32.mrb[0].mxu0
    %2326 = vmatprep.mubr.bf16.mxu0 0
    %2327 = vmatmul.mubr.bf16.gmra.mrb[0].mxu0 %v2101
    %v2328 = vpop.f32.mrb[0].mxu0
    %v2329 = vadd.f32 %v1836, %v2328
    %v2330 = vpop.f32.mrb[0].mxu0
    %v2331 = vpop.f32.mrb[0].mxu0
    %v2332 = vadd.f32 %v1841, %v2331
    %v2333 = vpop.f32.mrb[0].mxu0
    %2334 = vmatprep.mubr.bf16.mxu0 0
    %2335 = vmatmul.mubr.bf16.gmra.mrb[0].mxu0 %v2104
    %v2336 = vpop.f32.mrb[0].mxu0
    %v2337 = vadd.f32 %v1846, %v2336
    %v2338 = vpop.f32.mrb[0].mxu0
    %v2339 = vpop.f32.mrb[0].mxu0
    %v2340 = vadd.f32 %v1851, %v2339
    %v2341 = vpop.f32.mrb[0].mxu0
    %2342 = vmatprep.mubr.bf16.mxu0 0
    %2343 = vmatmul.mubr.bf16.gmra.mrb[0].mxu0 %v2107
    %v2344 = vpop.f32.mrb[0].mxu0
    %v2345 = vadd.f32 %v1856, %v2344
    %v2346 = vpop.f32.mrb[0].mxu0
    %v2347 = vpop.f32.mrb[0].mxu0
    %v2348 = vadd.f32 %v1861, %v2347
    %v2349 = vpop.f32.mrb[0].mxu0
    %2350 = vmatprep.mubr.bf16.mxu0 0
    %2351 = vmatmul.mubr.bf16.gmra.mrb[0].mxu0 %v2110
    %v2352 = vpop.f32.mrb[0].mxu0
    %v2353 = vadd.f32 %v1866, %v2352
    %v2354 = vpop.f32.mrb[0].mxu0
    %v2355 = vpop.f32.mrb[0].mxu0
    %v2356 = vadd.f32 %v1871, %v2355
    %v2357 = vpop.f32.mrb[0].mxu0
    %2358 = vmatprep.mubr.bf16.mxu0 0
    %2359 = vmatmul.mubr.bf16.gmra.mrb[0].mxu0 %v2113
    %v2360 = vpop.f32.mrb[0].mxu0
    %v2361 = vadd.f32 %v1876, %v2360
    %v2362 = vpop.f32.mrb[0].mxu0
    %v2363 = vpop.f32.mrb[0].mxu0
    %v2364 = vadd.f32 %v1881, %v2363
    %v2365 = vpop.f32.mrb[0].mxu0
    %2366 = vmatprep.mubr.bf16.mxu0 0
    %2367 = vmatmul.mubr.bf16.gmra.mrb[0].mxu0 %v2116
    %v2368 = vpop.f32.mrb[0].mxu0
    %v2369 = vadd.f32 %v1886, %v2368
    %v2370 = vpop.f32.mrb[0].mxu0
    %v2371 = vpop.f32.mrb[0].mxu0
    %v2372 = vadd.f32 %v1891, %v2371
    %v2373 = vpop.f32.mrb[0].mxu0
    %2374 = vdwg.mxu0
    %v2375 = vmax.f32 %v2153, 0.0
    %v2376 = vmax.f32 %v2156, 0.0
    %v2377 = vmax.f32 %v2161, 0.0
    %v2378 = vmax.f32 %v2164, 0.0
    %v2379 = vmax.f32 %v2169, 0.0
    %v2380 = vmax.f32 %v2172, 0.0
    %v2381 = vmax.f32 %v2177, 0.0
    %v2382 = vmax.f32 %v2180, 0.0
    %v2383 = vmax.f32 %v2185, 0.0
    %v2384 = vmax.f32 %v2188, 0.0
    %v2385 = vmax.f32 %v2193, 0.0
    %v2386 = vmax.f32 %v2196, 0.0
    %v2387 = vmax.f32 %v2201, 0.0
    %v2388 = vmax.f32 %v2204, 0.0
    %v2389 = vmax.f32 %v2209, 0.0
    %v2390 = vmax.f32 %v2212, 0.0
    %v2391 = vmax.f32 %v2217, 0.0
    %v2392 = vmax.f32 %v2220, 0.0
    %v2393 = vmax.f32 %v2225, 0.0
    %v2394 = vmax.f32 %v2228, 0.0
    %v2395 = vmax.f32 %v2233, 0.0
    %v2396 = vmax.f32 %v2236, 0.0
    %v2397 = vmax.f32 %v2241, 0.0
    %v2398 = vmax.f32 %v2244, 0.0
    %v2399 = vmax.f32 %v2249, 0.0
    %v2400 = vmax.f32 %v2252, 0.0
    %v2401 = vmax.f32 %v2257, 0.0
    %v2402 = vmax.f32 %v2260, 0.0
    %v2403 = vmax.f32 %v2265, 0.0
    %v2404 = vmax.f32 %v2268, 0.0
    %v2405 = vmax.f32 %v2273, 0.0
    %v2406 = vmax.f32 %v2276, 0.0
    %v2407 = vmax.f32 %v2281, 0.0
    %v2408 = vmax.f32 %v2284, 0.0
    %v2409 = vmax.f32 %v2289, 0.0
    %v2410 = vmax.f32 %v2292, 0.0
    %v2411 = vmax.f32 %v2297, 0.0
    %v2412 = vmax.f32 %v2300, 0.0
    %v2413 = vmax.f32 %v2305, 0.0
    %v2414 = vmax.f32 %v2308, 0.0
    %v2415 = vmax.f32 %v2313, 0.0
    %v2416 = vmax.f32 %v2316, 0.0
    %v2417 = vmax.f32 %v2321, 0.0
    %v2418 = vmax.f32 %v2324, 0.0
    %v2419 = vmax.f32 %v2329, 0.0
    %v2420 = vmax.f32 %v2332, 0.0
    %v2421 = vmax.f32 %v2337, 0.0
    %v2422 = vmax.f32 %v2340, 0.0
    %v2423 = vmax.f32 %v2345, 0.0
    %v2424 = vmax.f32 %v2348, 0.0
    %v2425 = vmax.f32 %v2353, 0.0
    %v2426 = vmax.f32 %v2356, 0.0
    %v2427 = vmax.f32 %v2361, 0.0
    %v2428 = vmax.f32 %v2364, 0.0
    %v2429 = vmax.f32 %v2369, 0.0
    %v2430 = vmax.f32 %v2372, 0.0
    %v2431 = vpack.c.bf16 %v2376, %v2375
    %v2432 = vpack.c.bf16 %v2378, %v2377
    %v2433 = vpack.c.bf16 %v2380, %v2379
    %v2434 = vpack.c.bf16 %v2382, %v2381
    %v2435 = vpack.c.bf16 %v2384, %v2383
    %v2436 = vpack.c.bf16 %v2386, %v2385
    %v2437 = vpack.c.bf16 %v2388, %v2387
    %v2438 = vpack.c.bf16 %v2390, %v2389
    %v2439 = vpack.c.bf16 %v2392, %v2391
    %v2440 = vpack.c.bf16 %v2394, %v2393
    %v2441 = vpack.c.bf16 %v2396, %v2395
    %v2442 = vpack.c.bf16 %v2398, %v2397
    %v2443 = vpack.c.bf16 %v2400, %v2399
    %v2444 = vpack.c.bf16 %v2402, %v2401
    %v2445 = vpack.c.bf16 %v2404, %v2403
    %v2446 = vpack.c.bf16 %v2406, %v2405
    %v2447 = vpack.c.bf16 %v2408, %v2407
    %v2448 = vpack.c.bf16 %v2410, %v2409
    %v2449 = vpack.c.bf16 %v2412, %v2411
    %v2450 = vpack.c.bf16 %v2414, %v2413
    %v2451 = vpack.c.bf16 %v2416, %v2415
    %v2452 = vpack.c.bf16 %v2418, %v2417
    %v2453 = vpack.c.bf16 %v2420, %v2419
    %v2454 = vpack.c.bf16 %v2422, %v2421
    %v2455 = vpack.c.bf16 %v2424, %v2423
    %v2456 = vpack.c.bf16 %v2426, %v2425
    %v2457 = vpack.c.bf16 %v2428, %v2427
    %v2458 = vpack.c.bf16 %v2430, %v2429
    %v2459 = vld [vmem:[%s9] sm:$0xff]
    %v2460 = vld [vmem:[%s9 + $0x8] sm:$0xff]
    %v2461 = vld [vmem:[%s9 + $0x10] sm:$0xff]
    %v2462 = vld [vmem:[%s9 + $0x18] sm:$0xff]
    %v2463 = vld [vmem:[%s10] sm:$0xff]
    %v2464 = vld [vmem:[%s10 + $0x8] sm:$0xff]
    %2466 = vset.pattern.permute.xlu0 0
    %2467 = vperm.xlu0 %2466, %v2463
    %v2468 = vpop.permute.xlu0 %2467
    %2471 = vset.pattern.permute.xlu0 0
    %2472 = vperm.xlu0 %2471, %v2464
    %v2473 = vpop.permute.xlu0 %2472
    %v2479 = vunpack.c.l.b16 %v2459
    %v2480 = vunpack.c.h.b16 %v2459
    %v2481 = vunpack.c.l.b16 %v2460
    %v2482 = vunpack.c.h.b16 %v2460
    %v2483 = vunpack.c.l.b16 %v2461
    %v2484 = vunpack.c.h.b16 %v2461
    %v2485 = vunpack.c.l.b16 %v2462
    %v2486 = vunpack.c.h.b16 %v2462
    %v2487 = vpack.c.b16 %v2483, %v2479
    %v2488 = vpack.c.b16 %v2484, %v2480
    %v2489 = vpack.c.b16 %v2485, %v2481
    %v2490 = vpack.c.b16 %v2486, %v2482
    %v2495 = vsel %vm2033, %v2490, 0
    %2497 = vmatprep.subr.bf16.mxu0 0
    %2498 = vmatpush1.bf16.msra.mxu0 %v2431
    %2499 = vmatprep.subr.bf16.mxu0 0
    %2500 = vmatpush1.bf16.msra.mxu0 %v2432
    %2501 = vmatprep.subr.bf16.mxu0 0
    %2502 = vmatpush1.bf16.msra.mxu0 %v2433
    %2503 = vmatprep.subr.bf16.mxu0 0
    %2504 = vmatpush1.bf16.msra.mxu0 %v2434
    %2505 = vmatprep.subr.bf16.mxu0 0
    %2506 = vmatpush1.bf16.msra.mxu0 %v2435
    %2507 = vmatprep.subr.bf16.mxu0 0
    %2508 = vmatpush1.bf16.msra.mxu0 %v2436
    %2509 = vmatprep.subr.bf16.mxu0 0
    %2510 = vmatpush1.bf16.msra.mxu0 %v2437
    %2511 = vmatprep.subr.bf16.mxu0 0
    %2512 = vmatpush1.bf16.msra.mxu0 %v2438
    %2513 = vmatprep.subr.bf16.mxu0 0
    %2514 = vmatpush1.bf16.msra.mxu0 %v2439
    %2515 = vmatprep.subr.bf16.mxu0 0
    %2516 = vmatpush1.bf16.msra.mxu0 %v2440
    %2517 = vmatprep.subr.bf16.mxu0 0
    %2518 = vmatpush1.bf16.msra.mxu0 %v2441
    %2519 = vmatprep.subr.bf16.mxu0 0
    %2520 = vmatpush1.bf16.msra.mxu0 %v2442
    %2521 = vmatprep.subr.bf16.mxu0 0
    %2522 = vmatpush1.bf16.msra.mxu0 %v2443
    %2523 = vmatprep.subr.bf16.mxu0 0
    %2524 = vmatpush1.bf16.msra.mxu0 %v2444
    %2525 = vmatprep.subr.bf16.mxu0 0
    %2526 = vmatpush1.bf16.msra.mxu0 %v2445
    %2527 = vmatprep.subr.bf16.mxu0 0
    %2528 = vmatpush1.bf16.msra.mxu0 %v2446
    %2529 = vmatprep.mubr.bf16.mxu0 %v2488
    %2530 = vmatmul.mubr.bf16.gmra.mrb[0].mxu0 %v2487
    %v2531 = vpop.f32.mrb[0].mxu0
    %v2532 = vadd.f32 %v2468, %v2531
    %v2533 = vpop.f32.mrb[0].mxu0
    %v2534 = vpop.f32.mrb[0].mxu0
    %v2535 = vadd.f32 %v2473, %v2534
    %v2536 = vpop.f32.mrb[0].mxu0
    %2537 = vdwg.mxu0
    %2538 = vmatprep.subr.bf16.mxu0 0
    %2539 = vmatpush1.bf16.msra.mxu0 %v2447
    %2540 = vmatprep.subr.bf16.mxu0 0
    %2541 = vmatpush1.bf16.msra.mxu0 %v2448
    %2542 = vmatprep.subr.bf16.mxu0 0
    %2543 = vmatpush1.bf16.msra.mxu0 %v2449
    %2544 = vmatprep.subr.bf16.mxu0 0
    %2545 = vmatpush1.bf16.msra.mxu0 %v2450
    %2546 = vmatprep.subr.bf16.mxu0 0
    %2547 = vmatpush1.bf16.msra.mxu0 %v2451
    %2548 = vmatprep.subr.bf16.mxu0 0
    %2549 = vmatpush1.bf16.msra.mxu0 %v2452
    %2550 = vmatprep.subr.bf16.mxu0 0
    %2551 = vmatpush1.bf16.msra.mxu0 %v2453
    %2552 = vmatprep.subr.bf16.mxu0 0
    %2553 = vmatpush1.bf16.msra.mxu0 %v2454
    %2554 = vmatprep.subr.bf16.mxu0 0
    %2555 = vmatpush1.bf16.msra.mxu0 %v2455
    %2556 = vmatprep.subr.bf16.mxu0 0
    %2557 = vmatpush1.bf16.msra.mxu0 %v2456
    %2558 = vmatprep.subr.bf16.mxu0 0
    %2559 = vmatpush1.bf16.msra.mxu0 %v2457
    %2560 = vmatprep.subr.bf16.mxu0 0
    %2561 = vmatpush1.bf16.msra.mxu0 %v2458
    %2562 = vmatprep.subr.bf16.mxu0 0
    %2563 = vmatpush1.bf16.msra.mxu0 0
    %2564 = vmatprep.subr.bf16.mxu0 0
    %2565 = vmatpush1.bf16.msra.mxu0 0
    %2566 = vmatprep.subr.bf16.mxu0 0
    %2567 = vmatpush1.bf16.msra.mxu0 0
    %2568 = vmatprep.subr.bf16.mxu0 0
    %2569 = vmatpush1.bf16.msra.mxu0 0
    %2570 = vmatprep.mubr.bf16.mxu0 %v2495
    %2571 = vmatmul.mubr.bf16.gmra.mrb[0].mxu0 %v2489
    %v2572 = vpop.f32.mrb[0].mxu0
    %v2573 = vadd.f32 %v2532, %v2572
    %v2574 = vpop.f32.mrb[0].mxu0
    %v2575 = vpop.f32.mrb[0].mxu0
    %v2576 = vadd.f32 %v2535, %v2575
    %v2577 = vpop.f32.mrb[0].mxu0
    %2578 = vdwg.mxu0
    %v2579 = vmax.f32 %v2573, 0.0
    %v2580 = vmax.f32 %v2576, 0.0
    %v2581 = vpack.c.bf16 %v2580, %v2579
    %v2582 = vld [vmem:[%s11] sm:$0xf]
    %v2583 = vld [vmem:[%s12] sm:$0xff]
    %2585 = vset.pattern.permute.xlu0 0
    %2586 = vperm.xlu0 %2585, %v2583
    %v2587 = vpop.permute.xlu0 %2586
    %vm2589 = vcmask 130048
    %v2591 = vsel %vm2589, %v2582, 0
    %2593 = vmatprep.subr.bf16.mxu0 0
    %2594 = vmatpush1.bf16.msra.mxu0 %v2581
    %2595 = vmatprep.subr.bf16.mxu0 0
    %2596 = vmatpush1.bf16.msra.mxu0 0
    %2597 = vmatprep.subr.bf16.mxu0 0
    %2598 = vmatpush1.bf16.msra.mxu0 0
    %2599 = vmatprep.subr.bf16.mxu0 0
    %2600 = vmatpush1.bf16.msra.mxu0 0
    %2601 = vmatprep.subr.bf16.mxu0 0
    %2602 = vmatpush1.bf16.msra.mxu0 0
    %2603 = vmatprep.subr.bf16.mxu0 0
    %2604 = vmatpush1.bf16.msra.mxu0 0
    %2605 = vmatprep.subr.bf16.mxu0 0
    %2606 = vmatpush1.bf16.msra.mxu0 0
    %2607 = vmatprep.subr.bf16.mxu0 0
    %2608 = vmatpush1.bf16.msra.mxu0 0
    %2609 = vmatprep.subr.bf16.mxu0 0
    %2610 = vmatpush1.bf16.msra.mxu0 0
    %2611 = vmatprep.subr.bf16.mxu0 0
    %2612 = vmatpush1.bf16.msra.mxu0 0
    %2613 = vmatprep.subr.bf16.mxu0 0
    %2614 = vmatpush1.bf16.msra.mxu0 0
    %2615 = vmatprep.subr.bf16.mxu0 0
    %2616 = vmatpush1.bf16.msra.mxu0 0
    %2617 = vmatprep.subr.bf16.mxu0 0
    %2618 = vmatpush1.bf16.msra.mxu0 0
    %2619 = vmatprep.subr.bf16.mxu0 0
    %2620 = vmatpush1.bf16.msra.mxu0 0
    %2621 = vmatprep.subr.bf16.mxu0 0
    %2622 = vmatpush1.bf16.msra.mxu0 0
    %2623 = vmatprep.subr.bf16.mxu0 0
    %2624 = vmatpush1.bf16.msra.mxu0 0
    %2625 = vmatprep.mubr.bf16.mxu0 0
    %2626 = vmatmul.mubr.bf16.gmra.mrb[0].mxu0 %v2591
    %v2627 = vpop.f32.mrb[0].mxu0
    %v2628 = vadd.f32 %v2587, %v2627
    %v2629 = vpop.f32.mrb[0].mxu0
    %v2630 = vpop.f32.mrb[0].mxu0
    %v2631 = vpop.f32.mrb[0].mxu0
    %2632 = vdwg.mxu0
    %v2633 = vtanh.pop %v2628
    %2634 = vst [vmem:[#allocation2] sm:$0xff] %v2633
    // Predicated region
    $region54: #{tpu_custom_call.1} parent=1 // pred_check
      _
    $region55: #{tpu_custom_call.1} parent=1 // pred_check_branch
      %2636 = sbr.rel (0) target = $region57
    $region56: #{tpu_custom_call.1} parent=1 // pred_region
      %s2638 = ssub.s32 128, 128
      %2639 = vsyncadd [#allocation3], %s2638
      %s2641 = sshll.u32 [#allocation2], 4
      %s2642 = int_to_ptr.vmem [resolvable:$true] %s2641
      %2644 = dma.vmem_to_hbm [thread:$0]  %s2642, 128, %s13, [#allocation3]
    $region57: #{tpu_custom_call.1} parent=1 // pred_fallthru
      _
    // Predicated region
    $region58: #{tpu_custom_call.1} parent=1 // pred_check
      _
    $region59: #{tpu_custom_call.1} parent=1 // pred_check_branch
      %2646 = sbr.rel (0) target = $region61
    $region60: #{tpu_custom_call.1} parent=1 // pred_region
      %2647 = dma.done [#allocation3], 128
    $region61: #{tpu_custom_call.1} parent=1 // pred_fallthru
      _
    %2648 = vsyncpa [#allocation3], 1

</llo_original>
